<compile_context>
chip_gen: v7x
topology: tpu7x:2x2x1
jax: 0.10.0
libtpu: 0.0.40
codegen_flags: <defaults>
</compile_context>

<pallas_src>
import jax
import jax.numpy as jnp
from jax import lax
from jax.experimental import pallas as pl
from jax.experimental.pallas import tpu as pltpu

KH = KW = 7
PAD = 3
R0 = 8            # sublane-aligned row where the pooled maps start in scratch


def _round_up(x, m):
    return (x + m - 1) // m * m


def spatial_attention_kernel(w_ref, b_ref, x_ref, o_ref, pad_ref):
    # w_ref:   SMEM (2*KH*KW,) conv weights, order [in_ch, ky, kx]; the
    #          avg-channel weights already carry the 1/C of the mean.
    # b_ref:   SMEM (1,) conv bias.
    # x_ref:   VMEM (Bt, C, H, W) input tile.
    # o_ref:   VMEM (Bt, 1, H, W) output tile.
    # pad_ref: VMEM (2, HP, Wp) f32 zero-bordered, lane-dense pooled maps.
    Bt, C, H, W = x_ref.shape
    _, HP, Wp = pad_ref.shape

    # Zero only the border strips, every grid step (NOT only at step 0: with
    # "parallel" megacore sharding the second core never runs step 0).
    # The interior rows [R0:R0+H, 0:W] are fully overwritten per batch element
    # below; the zero borders + zero tail lanes implement the conv's zero
    # padding and absorb the cyclic-roll wrap-around reads
    # (Wp = round_up(W + 2*PAD, 128) guarantees >= 2*PAD zeroed tail lanes).
    pad_ref[:, 0:R0, :] = jnp.zeros((2, R0, Wp), jnp.float32)
    pad_ref[:, R0 + H:, :] = jnp.zeros((2, HP - (R0 + H), Wp), jnp.float32)
    pad_ref[:, R0:R0 + H, W:] = jnp.zeros((2, H, Wp - W), jnp.float32)

    bias = b_ref[0]
    bias_map = jnp.full((H, Wp), bias, jnp.float32)   # hoisted broadcast

    @pl.loop(0, Bt)
    def _per_batch(b):
        # ---- single-pass channel reduction: each (H, W) plane is loaded once
        #      and feeds both the running sum and the running max ------------
        x0 = x_ref[b, 0].astype(jnp.float32)          # (H, W)

        def chan_body(c, carry):
            s, m = carry
            xc = x_ref[b, c].astype(jnp.float32)
            return s + xc, jnp.maximum(m, xc)

        ssum, smax = lax.fori_loop(1, C, chan_body, (x0, x0))

        # ---- write pooled maps into the zero-bordered scratch ---------------
        pad_ref[0, R0:R0 + H, 0:W] = ssum             # channel sum (mean via w)
        pad_ref[1, R0:R0 + H, 0:W] = smax             # channel max

        # ---- 7x7 conv: dy = sublane-offset load, dx = cyclic lane roll ------
        acc = bias_map
        for dy in range(KH):
            r0 = dy + (R0 - PAD)
            row_a = pad_ref[0, r0:r0 + H, :]          # (H, Wp)
            row_m = pad_ref[1, r0:r0 + H, :]
            for dx in range(KW):
                shift = (PAD - dx) % Wp               # rolled[x] = row[x+dx-PAD]
                if shift == 0:
                    sa, sm = row_a, row_m
                else:
                    sa = pltpu.roll(row_a, shift, 1)
                    sm = pltpu.roll(row_m, shift, 1)
                wa = w_ref[0 * KH * KW + dy * KW + dx]
                wm = w_ref[1 * KH * KW + dy * KW + dx]
                acc = acc + (wa * sa + wm * sm)

        o_ref[b, 0] = jax.nn.sigmoid(acc[:, :W]).astype(o_ref.dtype)


def spatial_attention(x, weight, bias, *, batch_tile=None):
    """x: (N, C, H, W); weight: (1, 2, 7, 7); bias: (1,). Returns (N, 1, H, W)."""
    N, C, H, W = x.shape

    HP = _round_up(R0 + H + PAD, 8)       # padded-scratch rows (sublane aligned)
    Wp = _round_up(W + 2 * PAD, 128)      # lane-dense padded width (>= W+2*PAD)

    # ---- per-generation VMEM budget -----------------------------------------
    try:
        info = pltpu.get_tpu_info()
        vmem_cap = int(getattr(info, "vmem_capacity_bytes", 64 << 20))
    except Exception:                      # be conservative: assume v7x (64 MiB)
        vmem_cap = 64 << 20
    budget = min(vmem_cap // 2, 96 << 20)  # ~32 MiB on v7x, ~64 MiB on v5e/v6e

    x_item = jnp.dtype(x.dtype).itemsize
    scratch_bytes = 2 * HP * Wp * 4
    slack = 2 << 20                        # compiler-internal scratch headroom

    def bytes_needed(bt, in_bufs):
        return (in_bufs * bt * C * H * W * x_item      # pipelined input blocks
                + 2 * bt * 1 * H * W * x_item          # double-buffered output
                + scratch_bytes + slack)

    # ---- budget-driven batch tile: biggest Bt whose blocks fit, >= 8 grid
    # steps when N allows it, exact divisor of N. ------------------------------
    if batch_tile is None:
        bt = max(1, N // 8)
        while bt > 1 and (N % bt != 0 or bytes_needed(bt, 2) > budget):
            bt -= 1
    else:
        bt = max(1, min(int(batch_tile), N))
        while N % bt:
            bt -= 1
    Bt = bt
    # TODO(synk): if even Bt=1 exceeds the budget (huge C*H*W, mainly v7x), add
    # a trailing "arbitrary" C grid axis that accumulates sum/max into pad_ref
    # and runs the conv only under pl.when(c == last).
    # TODO(synk): for N == 1 inference add a second parallel grid axis over H
    # tiles (3-row halo) so the second v7x TensorCore is not left idle.

    # Triple-buffer the input on big-VMEM chips (v5e/v6e) when the block is
    # large enough for DMA jitter to matter and 3 buffers still fit the budget;
    # keep default double buffering on v7x where VMEM is the scarce resource.
    use_triple = (vmem_cap >= (96 << 20)
                  and Bt * C * H * W * x_item >= (256 << 10)
                  and bytes_needed(Bt, 3) <= budget)
    in_bufs = 3 if use_triple else 2

    # Scoped VMEM limit derived from the actual need of the chosen blocks
    # (never clamped below it), leaving headroom for the compiler.
    need = bytes_needed(Bt, in_bufs)
    vmem_limit = int(min(max(need, 16 << 20), max(vmem_cap - (8 << 20), 16 << 20)))

    # Fold the 1/C of the channel mean into the avg-channel weights so the
    # kernel only needs the channel sum (no in-kernel divide / full-map mul).
    w = weight.astype(jnp.float32).reshape(2, KH, KW)
    w = w * jnp.array([1.0 / C, 1.0], jnp.float32).reshape(2, 1, 1)
    w_flat = w.reshape(-1)                                      # (98,)
    b_arr = bias.astype(jnp.float32).reshape(1)

    if use_triple:
        x_spec = pl.BlockSpec((Bt, C, H, W), lambda n: (n, 0, 0, 0),
                              pipeline_mode=pl.Buffered(3))
    else:
        x_spec = pl.BlockSpec((Bt, C, H, W), lambda n: (n, 0, 0, 0))

    # TODO(synk): a lane-dense (Bt, 1, H*W) out_spec (when H*W % 128 == 0)
    # would avoid masked vst.msk stores; skipped because the output is C-times
    # smaller than the input and the in-kernel (H,W)->(H*W,) relayout is not
    # free on the XLU.
    return pl.pallas_call(
        spatial_attention_kernel,
        out_shape=jax.ShapeDtypeStruct((N, 1, H, W), x.dtype),
        grid=(N // Bt,),
        in_specs=[
            pl.BlockSpec(memory_space=pltpu.MemorySpace.SMEM),     # conv weights
            pl.BlockSpec(memory_space=pltpu.MemorySpace.SMEM),     # conv bias
            x_spec,                                                # batch tile
        ],
        out_specs=pl.BlockSpec((Bt, 1, H, W), lambda n: (n, 0, 0, 0)),
        scratch_shapes=[pltpu.VMEM((2, HP, Wp), jnp.float32)],
        compiler_params=pltpu.CompilerParams(
            dimension_semantics=("parallel",),     # shard batch across TCs (v7x)
            vmem_limit_bytes=vmem_limit,
        ),
    )(w_flat, b_arr, x)


def spatial_attention_reference(x, weight, bias):
    avg = jnp.mean(x, axis=1, keepdims=True)
    mx = jnp.max(x, axis=1, keepdims=True)
    comb = jnp.concatenate([avg, mx], axis=1)
    out = jax.lax.conv_general_dilated(
        comb, weight, window_strides=(1, 1), padding=[(PAD, PAD), (PAD, PAD)],
        dimension_numbers=("NCHW", "OIHW", "NCHW"))
    return jax.nn.sigmoid(out + bias.reshape(1, 1, 1, 1))


if __name__ == "__main__":
    key = jax.random.PRNGKey(0)
    kx, kw, kb = jax.random.split(key, 3)

    N, C, H, W = 2, 4, 16, 16
    x = jax.random.normal(kx, (N, C, H, W), dtype=jnp.float32)

    # Deterministic parameter init matching nn.Conv2d(2, 1, 7) shapes:
    # weight (out=1, in=2, 7, 7), bias (1,); uniform(-k, k), k = 1/sqrt(2*7*7).
    fan_in = 2 * KH * KW
    k = 1.0 / jnp.sqrt(jnp.float32(fan_in))
    weight = jax.random.uniform(kw, (1, 2, KH, KW), jnp.float32, -k, k)
    bias = jax.random.uniform(kb, (1,), jnp.float32, -k, k)

    out = spatial_attention(x, weight, bias)
    out = jax.block_until_ready(out)

    ref = spatial_attention_reference(x, weight, bias)
    assert out.shape == (N, 1, H, W)
    assert jnp.allclose(out, ref, atol=1e-5, rtol=1e-5)

    print("KERNEL_OK")
</pallas_src>

<mosaic_0001>
module attributes {stable_mosaic.version = 11 : i64} {
  func.func @spatial_attention_kernel(%arg0: i32, %arg1: memref<98xf32, #tpu.memory_space<smem>>, %arg2: memref<1xf32, #tpu.memory_space<smem>>, %arg3: memref<1x4x16x16xf32, #tpu.memory_space<vmem>>, %arg4: memref<1x1x16x16xf32, #tpu.memory_space<vmem>>, %arg5: memref<2x32x128xf32, #tpu.memory_space<vmem>>) attributes {dimension_semantics = [#tpu.dimension_semantics<parallel>], iteration_bounds = array<i64: 2>, scalar_prefetch = 0 : i64, scratch_operands = 1 : i64, tpu.core_type = #tpu.core_type<tc>, window_params = [{transform_indices = @transform_0, window_bounds = array<i64: 98>}, {transform_indices = @transform_1, window_bounds = array<i64: 1>}, {transform_indices = @transform_2, window_bounds = array<i64: 1, 4, 16, 16>}, {transform_indices = @transform_3, window_bounds = array<i64: 1, 1, 16, 16>}]} {
    %cst = arith.constant 0.000000e+00 : f32
    %0 = vector.broadcast %cst : f32 to vector<2x8x128xf32>
    %c0 = arith.constant 0 : index
    %c0_0 = arith.constant 0 : index
    %c0_1 = arith.constant 0 : index
    %1 = vector.load %arg5[%c0, %c0_0, %c0_1] : memref<2x32x128xf32, #tpu.memory_space<vmem>>, vector<2x8x128xf32>
    tpu.vector_store %arg5[%c0, %c0_0, %c0_1], %0 {strides = array<i32>} : memref<2x32x128xf32, #tpu.memory_space<vmem>>, vector<2x8x128xf32>,
    %cst_2 = arith.constant 0.000000e+00 : f32
    %2 = vector.broadcast %cst_2 : f32 to vector<2x8x128xf32>
    %c0_3 = arith.constant 0 : index
    %c24 = arith.constant 24 : index
    %c0_4 = arith.constant 0 : index
    %3 = vector.load %arg5[%c0_3, %c24, %c0_4] : memref<2x32x128xf32, #tpu.memory_space<vmem>>, vector<2x8x128xf32>
    tpu.vector_store %arg5[%c0_3, %c24, %c0_4], %2 {strides = array<i32>} : memref<2x32x128xf32, #tpu.memory_space<vmem>>, vector<2x8x128xf32>,
    %cst_5 = arith.constant 0.000000e+00 : f32
    %4 = vector.broadcast %cst_5 : f32 to vector<2x16x112xf32>
    %c0_6 = arith.constant 0 : index
    %c8 = arith.constant 8 : index
    %c16 = arith.constant 16 : index
    %5 = vector.load %arg5[%c0_6, %c8, %c16] : memref<2x32x128xf32, #tpu.memory_space<vmem>>, vector<2x16x112xf32>
    tpu.vector_store %arg5[%c0_6, %c8, %c16], %4 {strides = array<i32>} : memref<2x32x128xf32, #tpu.memory_space<vmem>>, vector<2x16x112xf32>,
    %c0_7 = arith.constant 0 : index
    %6 = memref.load %arg2[%c0_7] : memref<1xf32, #tpu.memory_space<smem>>
    %7 = vector.broadcast %6 : f32 to vector<16x128xf32>
    %c0_i32 = arith.constant 0 : i32
    %c1_i32 = arith.constant 1 : i32
    %8 = arith.muli %c0_i32, %c1_i32 : i32
    %c0_i32_8 = arith.constant 0 : i32
    %9 = arith.addi %c0_i32_8, %8 : i32
    %10 = arith.index_cast %9 : i32 to index
    %c0_9 = arith.constant 0 : index
    %c0_10 = arith.constant 0 : index
    %c0_11 = arith.constant 0 : index
    %11 = vector.load %arg3[%10, %c0_9, %c0_10, %c0_11] : memref<1x4x16x16xf32, #tpu.memory_space<vmem>>, vector<1x1x16x16xf32>
    %12 = vector.shape_cast %11 : vector<1x1x16x16xf32> to vector<16x16xf32>
    %c1_i32_12 = arith.constant 1 : i32
    %c3_i32 = arith.constant 3 : i32
    %13 = arith.addi %c1_i32_12, %c3_i32 : i32
    %c1_i32_13 = arith.constant 1 : i32
    %14:2 = scf.for %arg6 = %c1_i32_12 to %13 step %c1_i32_13 iter_args(%arg7 = %12, %arg8 = %12) -> (vector<16x16xf32>, vector<16x16xf32>)  : i32 {
      %535 = arith.index_cast %9 : i32 to index
      %536 = arith.index_cast %arg6 : i32 to index
      %c0_152 = arith.constant 0 : index
      %c0_153 = arith.constant 0 : index
      %537 = vector.load %arg3[%535, %536, %c0_152, %c0_153] : memref<1x4x16x16xf32, #tpu.memory_space<vmem>>, vector<1x1x16x16xf32>
      %538 = vector.shape_cast %537 : vector<1x1x16x16xf32> to vector<16x16xf32>
      %539 = arith.addf %arg7, %538 : vector<16x16xf32>
      %540 = arith.maximumf %arg8, %538 : vector<16x16xf32>
      scf.yield %539, %540 : vector<16x16xf32>, vector<16x16xf32>
    }
    %c3_i32_14 = arith.constant 3 : i32
    %c0_15 = arith.constant 0 : index
    %c8_16 = arith.constant 8 : index
    %c0_17 = arith.constant 0 : index
    %15 = vector.load %arg5[%c0_15, %c8_16, %c0_17] : memref<2x32x128xf32, #tpu.memory_space<vmem>>, vector<1x16x16xf32>
    %16 = vector.shape_cast %15 : vector<1x16x16xf32> to vector<16x16xf32>
    %17 = vector.shape_cast %14#0 : vector<16x16xf32> to vector<1x16x16xf32>
    tpu.vector_store %arg5[%c0_15, %c8_16, %c0_17], %17 {strides = array<i32>} : memref<2x32x128xf32, #tpu.memory_space<vmem>>, vector<1x16x16xf32>,
    %c1 = arith.constant 1 : index
    %c8_18 = arith.constant 8 : index
    %c0_19 = arith.constant 0 : index
    %18 = vector.load %arg5[%c1, %c8_18, %c0_19] : memref<2x32x128xf32, #tpu.memory_space<vmem>>, vector<1x16x16xf32>
    %19 = vector.shape_cast %18 : vector<1x16x16xf32> to vector<16x16xf32>
    %20 = vector.shape_cast %14#1 : vector<16x16xf32> to vector<1x16x16xf32>
    tpu.vector_store %arg5[%c1, %c8_18, %c0_19], %20 {strides = array<i32>} : memref<2x32x128xf32, #tpu.memory_space<vmem>>, vector<1x16x16xf32>,
    %c0_20 = arith.constant 0 : index
    %c5 = arith.constant 5 : index
    %c0_21 = arith.constant 0 : index
    %21 = vector.load %arg5[%c0_20, %c5, %c0_21] : memref<2x32x128xf32, #tpu.memory_space<vmem>>, vector<1x16x128xf32>
    %22 = vector.shape_cast %21 : vector<1x16x128xf32> to vector<16x128xf32>
    %c1_22 = arith.constant 1 : index
    %c5_23 = arith.constant 5 : index
    %c0_24 = arith.constant 0 : index
    %23 = vector.load %arg5[%c1_22, %c5_23, %c0_24] : memref<2x32x128xf32, #tpu.memory_space<vmem>>, vector<1x16x128xf32>
    %24 = vector.shape_cast %23 : vector<1x16x128xf32> to vector<16x128xf32>
    %c3_i32_25 = arith.constant 3 : i32
    %25 = tpu.dynamic_rotate %22 by %c3_i32_25 dim 1 : vector<16x128xf32>, i32 -> vector<16x128xf32>
    %c3_i32_26 = arith.constant 3 : i32
    %26 = tpu.dynamic_rotate %24 by %c3_i32_26 dim 1 : vector<16x128xf32>, i32 -> vector<16x128xf32>
    %c0_27 = arith.constant 0 : index
    %27 = memref.load %arg1[%c0_27] : memref<98xf32, #tpu.memory_space<smem>>
    %c49 = arith.constant 49 : index
    %28 = memref.load %arg1[%c49] : memref<98xf32, #tpu.memory_space<smem>>
    %29 = vector.broadcast %27 : f32 to vector<16x128xf32>
    %30 = arith.mulf %29, %25 : vector<16x128xf32>
    %31 = vector.broadcast %28 : f32 to vector<16x128xf32>
    %32 = arith.mulf %31, %26 : vector<16x128xf32>
    %33 = arith.addf %30, %32 : vector<16x128xf32>
    %34 = arith.addf %7, %33 : vector<16x128xf32>
    %c2_i32 = arith.constant 2 : i32
    %35 = tpu.dynamic_rotate %22 by %c2_i32 dim 1 : vector<16x128xf32>, i32 -> vector<16x128xf32>
    %c2_i32_28 = arith.constant 2 : i32
    %36 = tpu.dynamic_rotate %24 by %c2_i32_28 dim 1 : vector<16x128xf32>, i32 -> vector<16x128xf32>
    %c1_29 = arith.constant 1 : index
    %37 = memref.load %arg1[%c1_29] : memref<98xf32, #tpu.memory_space<smem>>
    %c50 = arith.constant 50 : index
    %38 = memref.load %arg1[%c50] : memref<98xf32, #tpu.memory_space<smem>>
    %39 = vector.broadcast %37 : f32 to vector<16x128xf32>
    %40 = arith.mulf %39, %35 : vector<16x128xf32>
    %41 = vector.broadcast %38 : f32 to vector<16x128xf32>
    %42 = arith.mulf %41, %36 : vector<16x128xf32>
    %43 = arith.addf %40, %42 : vector<16x128xf32>
    %44 = arith.addf %34, %43 : vector<16x128xf32>
    %c1_i32_30 = arith.constant 1 : i32
    %45 = tpu.dynamic_rotate %22 by %c1_i32_30 dim 1 : vector<16x128xf32>, i32 -> vector<16x128xf32>
    %c1_i32_31 = arith.constant 1 : i32
    %46 = tpu.dynamic_rotate %24 by %c1_i32_31 dim 1 : vector<16x128xf32>, i32 -> vector<16x128xf32>
    %c2 = arith.constant 2 : index
    %47 = memref.load %arg1[%c2] : memref<98xf32, #tpu.memory_space<smem>>
    %c51 = arith.constant 51 : index
    %48 = memref.load %arg1[%c51] : memref<98xf32, #tpu.memory_space<smem>>
    %49 = vector.broadcast %47 : f32 to vector<16x128xf32>
    %50 = arith.mulf %49, %45 : vector<16x128xf32>
    %51 = vector.broadcast %48 : f32 to vector<16x128xf32>
    %52 = arith.mulf %51, %46 : vector<16x128xf32>
    %53 = arith.addf %50, %52 : vector<16x128xf32>
    %54 = arith.addf %44, %53 : vector<16x128xf32>
    %c3 = arith.constant 3 : index
    %55 = memref.load %arg1[%c3] : memref<98xf32, #tpu.memory_space<smem>>
    %c52 = arith.constant 52 : index
    %56 = memref.load %arg1[%c52] : memref<98xf32, #tpu.memory_space<smem>>
    %57 = vector.broadcast %55 : f32 to vector<16x128xf32>
    %58 = arith.mulf %57, %22 : vector<16x128xf32>
    %59 = vector.broadcast %56 : f32 to vector<16x128xf32>
    %60 = arith.mulf %59, %24 : vector<16x128xf32>
    %61 = arith.addf %58, %60 : vector<16x128xf32>
    %62 = arith.addf %54, %61 : vector<16x128xf32>
    %c127_i32 = arith.constant 127 : i32
    %63 = tpu.dynamic_rotate %22 by %c127_i32 dim 1 : vector<16x128xf32>, i32 -> vector<16x128xf32>
    %c127_i32_32 = arith.constant 127 : i32
    %64 = tpu.dynamic_rotate %24 by %c127_i32_32 dim 1 : vector<16x128xf32>, i32 -> vector<16x128xf32>
    %c4 = arith.constant 4 : index
    %65 = memref.load %arg1[%c4] : memref<98xf32, #tpu.memory_space<smem>>
    %c53 = arith.constant 53 : index
    %66 = memref.load %arg1[%c53] : memref<98xf32, #tpu.memory_space<smem>>
    %67 = vector.broadcast %65 : f32 to vector<16x128xf32>
    %68 = arith.mulf %67, %63 : vector<16x128xf32>
    %69 = vector.broadcast %66 : f32 to vector<16x128xf32>
    %70 = arith.mulf %69, %64 : vector<16x128xf32>
    %71 = arith.addf %68, %70 : vector<16x128xf32>
    %72 = arith.addf %62, %71 : vector<16x128xf32>
    %c126_i32 = arith.constant 126 : i32
    %73 = tpu.dynamic_rotate %22 by %c126_i32 dim 1 : vector<16x128xf32>, i32 -> vector<16x128xf32>
    %c126_i32_33 = arith.constant 126 : i32
    %74 = tpu.dynamic_rotate %24 by %c126_i32_33 dim 1 : vector<16x128xf32>, i32 -> vector<16x128xf32>
    %c5_34 = arith.constant 5 : index
    %75 = memref.load %arg1[%c5_34] : memref<98xf32, #tpu.memory_space<smem>>
    %c54 = arith.constant 54 : index
    %76 = memref.load %arg1[%c54] : memref<98xf32, #tpu.memory_space<smem>>
    %77 = vector.broadcast %75 : f32 to vector<16x128xf32>
    %78 = arith.mulf %77, %73 : vector<16x128xf32>
    %79 = vector.broadcast %76 : f32 to vector<16x128xf32>
    %80 = arith.mulf %79, %74 : vector<16x128xf32>
    %81 = arith.addf %78, %80 : vector<16x128xf32>
    %82 = arith.addf %72, %81 : vector<16x128xf32>
    %c125_i32 = arith.constant 125 : i32
    %83 = tpu.dynamic_rotate %22 by %c125_i32 dim 1 : vector<16x128xf32>, i32 -> vector<16x128xf32>
    %c125_i32_35 = arith.constant 125 : i32
    %84 = tpu.dynamic_rotate %24 by %c125_i32_35 dim 1 : vector<16x128xf32>, i32 -> vector<16x128xf32>
    %c6 = arith.constant 6 : index
    %85 = memref.load %arg1[%c6] : memref<98xf32, #tpu.memory_space<smem>>
    %c55 = arith.constant 55 : index
    %86 = memref.load %arg1[%c55] : memref<98xf32, #tpu.memory_space<smem>>
    %87 = vector.broadcast %85 : f32 to vector<16x128xf32>
    %88 = arith.mulf %87, %83 : vector<16x128xf32>
    %89 = vector.broadcast %86 : f32 to vector<16x128xf32>
    %90 = arith.mulf %89, %84 : vector<16x128xf32>
    %91 = arith.addf %88, %90 : vector<16x128xf32>
    %92 = arith.addf %82, %91 : vector<16x128xf32>
    %c0_36 = arith.constant 0 : index
    %c6_37 = arith.constant 6 : index
    %c0_38 = arith.constant 0 : index
    %93 = vector.load %arg5[%c0_36, %c6_37, %c0_38] : memref<2x32x128xf32, #tpu.memory_space<vmem>>, vector<1x16x128xf32>
    %94 = vector.shape_cast %93 : vector<1x16x128xf32> to vector<16x128xf32>
    %c1_39 = arith.constant 1 : index
    %c6_40 = arith.constant 6 : index
    %c0_41 = arith.constant 0 : index
    %95 = vector.load %arg5[%c1_39, %c6_40, %c0_41] : memref<2x32x128xf32, #tpu.memory_space<vmem>>, vector<1x16x128xf32>
    %96 = vector.shape_cast %95 : vector<1x16x128xf32> to vector<16x128xf32>
    %c3_i32_42 = arith.constant 3 : i32
    %97 = tpu.dynamic_rotate %94 by %c3_i32_42 dim 1 : vector<16x128xf32>, i32 -> vector<16x128xf32>
    %c3_i32_43 = arith.constant 3 : i32
    %98 = tpu.dynamic_rotate %96 by %c3_i32_43 dim 1 : vector<16x128xf32>, i32 -> vector<16x128xf32>
    %c7 = arith.constant 7 : index
    %99 = memref.load %arg1[%c7] : memref<98xf32, #tpu.memory_space<smem>>
    %c56 = arith.constant 56 : index
    %100 = memref.load %arg1[%c56] : memref<98xf32, #tpu.memory_space<smem>>
    %101 = vector.broadcast %99 : f32 to vector<16x128xf32>
    %102 = arith.mulf %101, %97 : vector<16x128xf32>
    %103 = vector.broadcast %100 : f32 to vector<16x128xf32>
    %104 = arith.mulf %103, %98 : vector<16x128xf32>
    %105 = arith.addf %102, %104 : vector<16x128xf32>
    %106 = arith.addf %92, %105 : vector<16x128xf32>
    %c2_i32_44 = arith.constant 2 : i32
    %107 = tpu.dynamic_rotate %94 by %c2_i32_44 dim 1 : vector<16x128xf32>, i32 -> vector<16x128xf32>
    %c2_i32_45 = arith.constant 2 : i32
    %108 = tpu.dynamic_rotate %96 by %c2_i32_45 dim 1 : vector<16x128xf32>, i32 -> vector<16x128xf32>
    %c8_46 = arith.constant 8 : index
    %109 = memref.load %arg1[%c8_46] : memref<98xf32, #tpu.memory_space<smem>>
    %c57 = arith.constant 57 : index
    %110 = memref.load %arg1[%c57] : memref<98xf32, #tpu.memory_space<smem>>
    %111 = vector.broadcast %109 : f32 to vector<16x128xf32>
    %112 = arith.mulf %111, %107 : vector<16x128xf32>
    %113 = vector.broadcast %110 : f32 to vector<16x128xf32>
    %114 = arith.mulf %113, %108 : vector<16x128xf32>
    %115 = arith.addf %112, %114 : vector<16x128xf32>
    %116 = arith.addf %106, %115 : vector<16x128xf32>
    %c1_i32_47 = arith.constant 1 : i32
    %117 = tpu.dynamic_rotate %94 by %c1_i32_47 dim 1 : vector<16x128xf32>, i32 -> vector<16x128xf32>
    %c1_i32_48 = arith.constant 1 : i32
    %118 = tpu.dynamic_rotate %96 by %c1_i32_48 dim 1 : vector<16x128xf32>, i32 -> vector<16x128xf32>
    %c9 = arith.constant 9 : index
    %119 = memref.load %arg1[%c9] : memref<98xf32, #tpu.memory_space<smem>>
    %c58 = arith.constant 58 : index
    %120 = memref.load %arg1[%c58] : memref<98xf32, #tpu.memory_space<smem>>
    %121 = vector.broadcast %119 : f32 to vector<16x128xf32>
    %122 = arith.mulf %121, %117 : vector<16x128xf32>
    %123 = vector.broadcast %120 : f32 to vector<16x128xf32>
    %124 = arith.mulf %123, %118 : vector<16x128xf32>
    %125 = arith.addf %122, %124 : vector<16x128xf32>
    %126 = arith.addf %116, %125 : vector<16x128xf32>
    %c10 = arith.constant 10 : index
    %127 = memref.load %arg1[%c10] : memref<98xf32, #tpu.memory_space<smem>>
    %c59 = arith.constant 59 : index
    %128 = memref.load %arg1[%c59] : memref<98xf32, #tpu.memory_space<smem>>
    %129 = vector.broadcast %127 : f32 to vector<16x128xf32>
    %130 = arith.mulf %129, %94 : vector<16x128xf32>
    %131 = vector.broadcast %128 : f32 to vector<16x128xf32>
    %132 = arith.mulf %131, %96 : vector<16x128xf32>
    %133 = arith.addf %130, %132 : vector<16x128xf32>
    %134 = arith.addf %126, %133 : vector<16x128xf32>
    %c127_i32_49 = arith.constant 127 : i32
    %135 = tpu.dynamic_rotate %94 by %c127_i32_49 dim 1 : vector<16x128xf32>, i32 -> vector<16x128xf32>
    %c127_i32_50 = arith.constant 127 : i32
    %136 = tpu.dynamic_rotate %96 by %c127_i32_50 dim 1 : vector<16x128xf32>, i32 -> vector<16x128xf32>
    %c11 = arith.constant 11 : index
    %137 = memref.load %arg1[%c11] : memref<98xf32, #tpu.memory_space<smem>>
    %c60 = arith.constant 60 : index
    %138 = memref.load %arg1[%c60] : memref<98xf32, #tpu.memory_space<smem>>
    %139 = vector.broadcast %137 : f32 to vector<16x128xf32>
    %140 = arith.mulf %139, %135 : vector<16x128xf32>
    %141 = vector.broadcast %138 : f32 to vector<16x128xf32>
    %142 = arith.mulf %141, %136 : vector<16x128xf32>
    %143 = arith.addf %140, %142 : vector<16x128xf32>
    %144 = arith.addf %134, %143 : vector<16x128xf32>
    %c126_i32_51 = arith.constant 126 : i32
    %145 = tpu.dynamic_rotate %94 by %c126_i32_51 dim 1 : vector<16x128xf32>, i32 -> vector<16x128xf32>
    %c126_i32_52 = arith.constant 126 : i32
    %146 = tpu.dynamic_rotate %96 by %c126_i32_52 dim 1 : vector<16x128xf32>, i32 -> vector<16x128xf32>
    %c12 = arith.constant 12 : index
    %147 = memref.load %arg1[%c12] : memref<98xf32, #tpu.memory_space<smem>>
    %c61 = arith.constant 61 : index
    %148 = memref.load %arg1[%c61] : memref<98xf32, #tpu.memory_space<smem>>
    %149 = vector.broadcast %147 : f32 to vector<16x128xf32>
    %150 = arith.mulf %149, %145 : vector<16x128xf32>
    %151 = vector.broadcast %148 : f32 to vector<16x128xf32>
    %152 = arith.mulf %151, %146 : vector<16x128xf32>
    %153 = arith.addf %150, %152 : vector<16x128xf32>
    %154 = arith.addf %144, %153 : vector<16x128xf32>
    %c125_i32_53 = arith.constant 125 : i32
    %155 = tpu.dynamic_rotate %94 by %c125_i32_53 dim 1 : vector<16x128xf32>, i32 -> vector<16x128xf32>
    %c125_i32_54 = arith.constant 125 : i32
    %156 = tpu.dynamic_rotate %96 by %c125_i32_54 dim 1 : vector<16x128xf32>, i32 -> vector<16x128xf32>
    %c13 = arith.constant 13 : index
    %157 = memref.load %arg1[%c13] : memref<98xf32, #tpu.memory_space<smem>>
    %c62 = arith.constant 62 : index
    %158 = memref.load %arg1[%c62] : memref<98xf32, #tpu.memory_space<smem>>
    %159 = vector.broadcast %157 : f32 to vector<16x128xf32>
    %160 = arith.mulf %159, %155 : vector<16x128xf32>
    %161 = vector.broadcast %158 : f32 to vector<16x128xf32>
    %162 = arith.mulf %161, %156 : vector<16x128xf32>
    %163 = arith.addf %160, %162 : vector<16x128xf32>
    %164 = arith.addf %154, %163 : vector<16x128xf32>
    %c0_55 = arith.constant 0 : index
    %c7_56 = arith.constant 7 : index
    %c0_57 = arith.constant 0 : index
    %165 = vector.load %arg5[%c0_55, %c7_56, %c0_57] : memref<2x32x128xf32, #tpu.memory_space<vmem>>, vector<1x16x128xf32>
    %166 = vector.shape_cast %165 : vector<1x16x128xf32> to vector<16x128xf32>
    %c1_58 = arith.constant 1 : index
    %c7_59 = arith.constant 7 : index
    %c0_60 = arith.constant 0 : index
    %167 = vector.load %arg5[%c1_58, %c7_59, %c0_60] : memref<2x32x128xf32, #tpu.memory_space<vmem>>, vector<1x16x128xf32>
    %168 = vector.shape_cast %167 : vector<1x16x128xf32> to vector<16x128xf32>
    %c3_i32_61 = arith.constant 3 : i32
    %169 = tpu.dynamic_rotate %166 by %c3_i32_61 dim 1 : vector<16x128xf32>, i32 -> vector<16x128xf32>
    %c3_i32_62 = arith.constant 3 : i32
    %170 = tpu.dynamic_rotate %168 by %c3_i32_62 dim 1 : vector<16x128xf32>, i32 -> vector<16x128xf32>
    %c14 = arith.constant 14 : index
    %171 = memref.load %arg1[%c14] : memref<98xf32, #tpu.memory_space<smem>>
    %c63 = arith.constant 63 : index
    %172 = memref.load %arg1[%c63] : memref<98xf32, #tpu.memory_space<smem>>
    %173 = vector.broadcast %171 : f32 to vector<16x128xf32>
    %174 = arith.mulf %173, %169 : vector<16x128xf32>
    %175 = vector.broadcast %172 : f32 to vector<16x128xf32>
    %176 = arith.mulf %175, %170 : vector<16x128xf32>
    %177 = arith.addf %174, %176 : vector<16x128xf32>
    %178 = arith.addf %164, %177 : vector<16x128xf32>
    %c2_i32_63 = arith.constant 2 : i32
    %179 = tpu.dynamic_rotate %166 by %c2_i32_63 dim 1 : vector<16x128xf32>, i32 -> vector<16x128xf32>
    %c2_i32_64 = arith.constant 2 : i32
    %180 = tpu.dynamic_rotate %168 by %c2_i32_64 dim 1 : vector<16x128xf32>, i32 -> vector<16x128xf32>
    %c15 = arith.constant 15 : index
    %181 = memref.load %arg1[%c15] : memref<98xf32, #tpu.memory_space<smem>>
    %c64 = arith.constant 64 : index
    %182 = memref.load %arg1[%c64] : memref<98xf32, #tpu.memory_space<smem>>
    %183 = vector.broadcast %181 : f32 to vector<16x128xf32>
    %184 = arith.mulf %183, %179 : vector<16x128xf32>
    %185 = vector.broadcast %182 : f32 to vector<16x128xf32>
    %186 = arith.mulf %185, %180 : vector<16x128xf32>
    %187 = arith.addf %184, %186 : vector<16x128xf32>
    %188 = arith.addf %178, %187 : vector<16x128xf32>
    %c1_i32_65 = arith.constant 1 : i32
    %189 = tpu.dynamic_rotate %166 by %c1_i32_65 dim 1 : vector<16x128xf32>, i32 -> vector<16x128xf32>
    %c1_i32_66 = arith.constant 1 : i32
    %190 = tpu.dynamic_rotate %168 by %c1_i32_66 dim 1 : vector<16x128xf32>, i32 -> vector<16x128xf32>
    %c16_67 = arith.constant 16 : index
    %191 = memref.load %arg1[%c16_67] : memref<98xf32, #tpu.memory_space<smem>>
    %c65 = arith.constant 65 : index
    %192 = memref.load %arg1[%c65] : memref<98xf32, #tpu.memory_space<smem>>
    %193 = vector.broadcast %191 : f32 to vector<16x128xf32>
    %194 = arith.mulf %193, %189 : vector<16x128xf32>
    %195 = vector.broadcast %192 : f32 to vector<16x128xf32>
    %196 = arith.mulf %195, %190 : vector<16x128xf32>
    %197 = arith.addf %194, %196 : vector<16x128xf32>
    %198 = arith.addf %188, %197 : vector<16x128xf32>
    %c17 = arith.constant 17 : index
    %199 = memref.load %arg1[%c17] : memref<98xf32, #tpu.memory_space<smem>>
    %c66 = arith.constant 66 : index
    %200 = memref.load %arg1[%c66] : memref<98xf32, #tpu.memory_space<smem>>
    %201 = vector.broadcast %199 : f32 to vector<16x128xf32>
    %202 = arith.mulf %201, %166 : vector<16x128xf32>
    %203 = vector.broadcast %200 : f32 to vector<16x128xf32>
    %204 = arith.mulf %203, %168 : vector<16x128xf32>
    %205 = arith.addf %202, %204 : vector<16x128xf32>
    %206 = arith.addf %198, %205 : vector<16x128xf32>
    %c127_i32_68 = arith.constant 127 : i32
    %207 = tpu.dynamic_rotate %166 by %c127_i32_68 dim 1 : vector<16x128xf32>, i32 -> vector<16x128xf32>
    %c127_i32_69 = arith.constant 127 : i32
    %208 = tpu.dynamic_rotate %168 by %c127_i32_69 dim 1 : vector<16x128xf32>, i32 -> vector<16x128xf32>
    %c18 = arith.constant 18 : index
    %209 = memref.load %arg1[%c18] : memref<98xf32, #tpu.memory_space<smem>>
    %c67 = arith.constant 67 : index
    %210 = memref.load %arg1[%c67] : memref<98xf32, #tpu.memory_space<smem>>
    %211 = vector.broadcast %209 : f32 to vector<16x128xf32>
    %212 = arith.mulf %211, %207 : vector<16x128xf32>
    %213 = vector.broadcast %210 : f32 to vector<16x128xf32>
    %214 = arith.mulf %213, %208 : vector<16x128xf32>
    %215 = arith.addf %212, %214 : vector<16x128xf32>
    %216 = arith.addf %206, %215 : vector<16x128xf32>
    %c126_i32_70 = arith.constant 126 : i32
    %217 = tpu.dynamic_rotate %166 by %c126_i32_70 dim 1 : vector<16x128xf32>, i32 -> vector<16x128xf32>
    %c126_i32_71 = arith.constant 126 : i32
    %218 = tpu.dynamic_rotate %168 by %c126_i32_71 dim 1 : vector<16x128xf32>, i32 -> vector<16x128xf32>
    %c19 = arith.constant 19 : index
    %219 = memref.load %arg1[%c19] : memref<98xf32, #tpu.memory_space<smem>>
    %c68 = arith.constant 68 : index
    %220 = memref.load %arg1[%c68] : memref<98xf32, #tpu.memory_space<smem>>
    %221 = vector.broadcast %219 : f32 to vector<16x128xf32>
    %222 = arith.mulf %221, %217 : vector<16x128xf32>
    %223 = vector.broadcast %220 : f32 to vector<16x128xf32>
    %224 = arith.mulf %223, %218 : vector<16x128xf32>
    %225 = arith.addf %222, %224 : vector<16x128xf32>
    %226 = arith.addf %216, %225 : vector<16x128xf32>
    %c125_i32_72 = arith.constant 125 : i32
    %227 = tpu.dynamic_rotate %166 by %c125_i32_72 dim 1 : vector<16x128xf32>, i32 -> vector<16x128xf32>
    %c125_i32_73 = arith.constant 125 : i32
    %228 = tpu.dynamic_rotate %168 by %c125_i32_73 dim 1 : vector<16x128xf32>, i32 -> vector<16x128xf32>
    %c20 = arith.constant 20 : index
    %229 = memref.load %arg1[%c20] : memref<98xf32, #tpu.memory_space<smem>>
    %c69 = arith.constant 69 : index
    %230 = memref.load %arg1[%c69] : memref<98xf32, #tpu.memory_space<smem>>
    %231 = vector.broadcast %229 : f32 to vector<16x128xf32>
    %232 = arith.mulf %231, %227 : vector<16x128xf32>
    %233 = vector.broadcast %230 : f32 to vector<16x128xf32>
    %234 = arith.mulf %233, %228 : vector<16x128xf32>
    %235 = arith.addf %232, %234 : vector<16x128xf32>
    %236 = arith.addf %226, %235 : vector<16x128xf32>
    %c0_74 = arith.constant 0 : index
    %c8_75 = arith.constant 8 : index
    %c0_76 = arith.constant 0 : index
    %237 = vector.load %arg5[%c0_74, %c8_75, %c0_76] : memref<2x32x128xf32, #tpu.memory_space<vmem>>, vector<1x16x128xf32>
    %238 = vector.shape_cast %237 : vector<1x16x128xf32> to vector<16x128xf32>
    %c1_77 = arith.constant 1 : index
    %c8_78 = arith.constant 8 : index
    %c0_79 = arith.constant 0 : index
    %239 = vector.load %arg5[%c1_77, %c8_78, %c0_79] : memref<2x32x128xf32, #tpu.memory_space<vmem>>, vector<1x16x128xf32>
    %240 = vector.shape_cast %239 : vector<1x16x128xf32> to vector<16x128xf32>
    %c3_i32_80 = arith.constant 3 : i32
    %241 = tpu.dynamic_rotate %238 by %c3_i32_80 dim 1 : vector<16x128xf32>, i32 -> vector<16x128xf32>
    %c3_i32_81 = arith.constant 3 : i32
    %242 = tpu.dynamic_rotate %240 by %c3_i32_81 dim 1 : vector<16x128xf32>, i32 -> vector<16x128xf32>
    %c21 = arith.constant 21 : index
    %243 = memref.load %arg1[%c21] : memref<98xf32, #tpu.memory_space<smem>>
    %c70 = arith.constant 70 : index
    %244 = memref.load %arg1[%c70] : memref<98xf32, #tpu.memory_space<smem>>
    %245 = vector.broadcast %243 : f32 to vector<16x128xf32>
    %246 = arith.mulf %245, %241 : vector<16x128xf32>
    %247 = vector.broadcast %244 : f32 to vector<16x128xf32>
    %248 = arith.mulf %247, %242 : vector<16x128xf32>
    %249 = arith.addf %246, %248 : vector<16x128xf32>
    %250 = arith.addf %236, %249 : vector<16x128xf32>
    %c2_i32_82 = arith.constant 2 : i32
    %251 = tpu.dynamic_rotate %238 by %c2_i32_82 dim 1 : vector<16x128xf32>, i32 -> vector<16x128xf32>
    %c2_i32_83 = arith.constant 2 : i32
    %252 = tpu.dynamic_rotate %240 by %c2_i32_83 dim 1 : vector<16x128xf32>, i32 -> vector<16x128xf32>
    %c22 = arith.constant 22 : index
    %253 = memref.load %arg1[%c22] : memref<98xf32, #tpu.memory_space<smem>>
    %c71 = arith.constant 71 : index
    %254 = memref.load %arg1[%c71] : memref<98xf32, #tpu.memory_space<smem>>
    %255 = vector.broadcast %253 : f32 to vector<16x128xf32>
    %256 = arith.mulf %255, %251 : vector<16x128xf32>
    %257 = vector.broadcast %254 : f32 to vector<16x128xf32>
    %258 = arith.mulf %257, %252 : vector<16x128xf32>
    %259 = arith.addf %256, %258 : vector<16x128xf32>
    %260 = arith.addf %250, %259 : vector<16x128xf32>
    %c1_i32_84 = arith.constant 1 : i32
    %261 = tpu.dynamic_rotate %238 by %c1_i32_84 dim 1 : vector<16x128xf32>, i32 -> vector<16x128xf32>
    %c1_i32_85 = arith.constant 1 : i32
    %262 = tpu.dynamic_rotate %240 by %c1_i32_85 dim 1 : vector<16x128xf32>, i32 -> vector<16x128xf32>
    %c23 = arith.constant 23 : index
    %263 = memref.load %arg1[%c23] : memref<98xf32, #tpu.memory_space<smem>>
    %c72 = arith.constant 72 : index
    %264 = memref.load %arg1[%c72] : memref<98xf32, #tpu.memory_space<smem>>
    %265 = vector.broadcast %263 : f32 to vector<16x128xf32>
    %266 = arith.mulf %265, %261 : vector<16x128xf32>
    %267 = vector.broadcast %264 : f32 to vector<16x128xf32>
    %268 = arith.mulf %267, %262 : vector<16x128xf32>
    %269 = arith.addf %266, %268 : vector<16x128xf32>
    %270 = arith.addf %260, %269 : vector<16x128xf32>
    %c24_86 = arith.constant 24 : index
    %271 = memref.load %arg1[%c24_86] : memref<98xf32, #tpu.memory_space<smem>>
    %c73 = arith.constant 73 : index
    %272 = memref.load %arg1[%c73] : memref<98xf32, #tpu.memory_space<smem>>
    %273 = vector.broadcast %271 : f32 to vector<16x128xf32>
    %274 = arith.mulf %273, %238 : vector<16x128xf32>
    %275 = vector.broadcast %272 : f32 to vector<16x128xf32>
    %276 = arith.mulf %275, %240 : vector<16x128xf32>
    %277 = arith.addf %274, %276 : vector<16x128xf32>
    %278 = arith.addf %270, %277 : vector<16x128xf32>
    %c127_i32_87 = arith.constant 127 : i32
    %279 = tpu.dynamic_rotate %238 by %c127_i32_87 dim 1 : vector<16x128xf32>, i32 -> vector<16x128xf32>
    %c127_i32_88 = arith.constant 127 : i32
    %280 = tpu.dynamic_rotate %240 by %c127_i32_88 dim 1 : vector<16x128xf32>, i32 -> vector<16x128xf32>
    %c25 = arith.constant 25 : index
    %281 = memref.load %arg1[%c25] : memref<98xf32, #tpu.memory_space<smem>>
    %c74 = arith.constant 74 : index
    %282 = memref.load %arg1[%c74] : memref<98xf32, #tpu.memory_space<smem>>
    %283 = vector.broadcast %281 : f32 to vector<16x128xf32>
    %284 = arith.mulf %283, %279 : vector<16x128xf32>
    %285 = vector.broadcast %282 : f32 to vector<16x128xf32>
    %286 = arith.mulf %285, %280 : vector<16x128xf32>
    %287 = arith.addf %284, %286 : vector<16x128xf32>
    %288 = arith.addf %278, %287 : vector<16x128xf32>
    %c126_i32_89 = arith.constant 126 : i32
    %289 = tpu.dynamic_rotate %238 by %c126_i32_89 dim 1 : vector<16x128xf32>, i32 -> vector<16x128xf32>
    %c126_i32_90 = arith.constant 126 : i32
    %290 = tpu.dynamic_rotate %240 by %c126_i32_90 dim 1 : vector<16x128xf32>, i32 -> vector<16x128xf32>
    %c26 = arith.constant 26 : index
    %291 = memref.load %arg1[%c26] : memref<98xf32, #tpu.memory_space<smem>>
    %c75 = arith.constant 75 : index
    %292 = memref.load %arg1[%c75] : memref<98xf32, #tpu.memory_space<smem>>
    %293 = vector.broadcast %291 : f32 to vector<16x128xf32>
    %294 = arith.mulf %293, %289 : vector<16x128xf32>
    %295 = vector.broadcast %292 : f32 to vector<16x128xf32>
    %296 = arith.mulf %295, %290 : vector<16x128xf32>
    %297 = arith.addf %294, %296 : vector<16x128xf32>
    %298 = arith.addf %288, %297 : vector<16x128xf32>
    %c125_i32_91 = arith.constant 125 : i32
    %299 = tpu.dynamic_rotate %238 by %c125_i32_91 dim 1 : vector<16x128xf32>, i32 -> vector<16x128xf32>
    %c125_i32_92 = arith.constant 125 : i32
    %300 = tpu.dynamic_rotate %240 by %c125_i32_92 dim 1 : vector<16x128xf32>, i32 -> vector<16x128xf32>
    %c27 = arith.constant 27 : index
    %301 = memref.load %arg1[%c27] : memref<98xf32, #tpu.memory_space<smem>>
    %c76 = arith.constant 76 : index
    %302 = memref.load %arg1[%c76] : memref<98xf32, #tpu.memory_space<smem>>
    %303 = vector.broadcast %301 : f32 to vector<16x128xf32>
    %304 = arith.mulf %303, %299 : vector<16x128xf32>
    %305 = vector.broadcast %302 : f32 to vector<16x128xf32>
    %306 = arith.mulf %305, %300 : vector<16x128xf32>
    %307 = arith.addf %304, %306 : vector<16x128xf32>
    %308 = arith.addf %298, %307 : vector<16x128xf32>
    %c0_93 = arith.constant 0 : index
    %c9_94 = arith.constant 9 : index
    %c0_95 = arith.constant 0 : index
    %309 = vector.load %arg5[%c0_93, %c9_94, %c0_95] : memref<2x32x128xf32, #tpu.memory_space<vmem>>, vector<1x16x128xf32>
    %310 = vector.shape_cast %309 : vector<1x16x128xf32> to vector<16x128xf32>
    %c1_96 = arith.constant 1 : index
    %c9_97 = arith.constant 9 : index
    %c0_98 = arith.constant 0 : index
    %311 = vector.load %arg5[%c1_96, %c9_97, %c0_98] : memref<2x32x128xf32, #tpu.memory_space<vmem>>, vector<1x16x128xf32>
    %312 = vector.shape_cast %311 : vector<1x16x128xf32> to vector<16x128xf32>
    %c3_i32_99 = arith.constant 3 : i32
    %313 = tpu.dynamic_rotate %310 by %c3_i32_99 dim 1 : vector<16x128xf32>, i32 -> vector<16x128xf32>
    %c3_i32_100 = arith.constant 3 : i32
    %314 = tpu.dynamic_rotate %312 by %c3_i32_100 dim 1 : vector<16x128xf32>, i32 -> vector<16x128xf32>
    %c28 = arith.constant 28 : index
    %315 = memref.load %arg1[%c28] : memref<98xf32, #tpu.memory_space<smem>>
    %c77 = arith.constant 77 : index
    %316 = memref.load %arg1[%c77] : memref<98xf32, #tpu.memory_space<smem>>
    %317 = vector.broadcast %315 : f32 to vector<16x128xf32>
    %318 = arith.mulf %317, %313 : vector<16x128xf32>
    %319 = vector.broadcast %316 : f32 to vector<16x128xf32>
    %320 = arith.mulf %319, %314 : vector<16x128xf32>
    %321 = arith.addf %318, %320 : vector<16x128xf32>
    %322 = arith.addf %308, %321 : vector<16x128xf32>
    %c2_i32_101 = arith.constant 2 : i32
    %323 = tpu.dynamic_rotate %310 by %c2_i32_101 dim 1 : vector<16x128xf32>, i32 -> vector<16x128xf32>
    %c2_i32_102 = arith.constant 2 : i32
    %324 = tpu.dynamic_rotate %312 by %c2_i32_102 dim 1 : vector<16x128xf32>, i32 -> vector<16x128xf32>
    %c29 = arith.constant 29 : index
    %325 = memref.load %arg1[%c29] : memref<98xf32, #tpu.memory_space<smem>>
    %c78 = arith.constant 78 : index
    %326 = memref.load %arg1[%c78] : memref<98xf32, #tpu.memory_space<smem>>
    %327 = vector.broadcast %325 : f32 to vector<16x128xf32>
    %328 = arith.mulf %327, %323 : vector<16x128xf32>
    %329 = vector.broadcast %326 : f32 to vector<16x128xf32>
    %330 = arith.mulf %329, %324 : vector<16x128xf32>
    %331 = arith.addf %328, %330 : vector<16x128xf32>
    %332 = arith.addf %322, %331 : vector<16x128xf32>
    %c1_i32_103 = arith.constant 1 : i32
    %333 = tpu.dynamic_rotate %310 by %c1_i32_103 dim 1 : vector<16x128xf32>, i32 -> vector<16x128xf32>
    %c1_i32_104 = arith.constant 1 : i32
    %334 = tpu.dynamic_rotate %312 by %c1_i32_104 dim 1 : vector<16x128xf32>, i32 -> vector<16x128xf32>
    %c30 = arith.constant 30 : index
    %335 = memref.load %arg1[%c30] : memref<98xf32, #tpu.memory_space<smem>>
    %c79 = arith.constant 79 : index
    %336 = memref.load %arg1[%c79] : memref<98xf32, #tpu.memory_space<smem>>
    %337 = vector.broadcast %335 : f32 to vector<16x128xf32>
    %338 = arith.mulf %337, %333 : vector<16x128xf32>
    %339 = vector.broadcast %336 : f32 to vector<16x128xf32>
    %340 = arith.mulf %339, %334 : vector<16x128xf32>
    %341 = arith.addf %338, %340 : vector<16x128xf32>
    %342 = arith.addf %332, %341 : vector<16x128xf32>
    %c31 = arith.constant 31 : index
    %343 = memref.load %arg1[%c31] : memref<98xf32, #tpu.memory_space<smem>>
    %c80 = arith.constant 80 : index
    %344 = memref.load %arg1[%c80] : memref<98xf32, #tpu.memory_space<smem>>
    %345 = vector.broadcast %343 : f32 to vector<16x128xf32>
    %346 = arith.mulf %345, %310 : vector<16x128xf32>
    %347 = vector.broadcast %344 : f32 to vector<16x128xf32>
    %348 = arith.mulf %347, %312 : vector<16x128xf32>
    %349 = arith.addf %346, %348 : vector<16x128xf32>
    %350 = arith.addf %342, %349 : vector<16x128xf32>
    %c127_i32_105 = arith.constant 127 : i32
    %351 = tpu.dynamic_rotate %310 by %c127_i32_105 dim 1 : vector<16x128xf32>, i32 -> vector<16x128xf32>
    %c127_i32_106 = arith.constant 127 : i32
    %352 = tpu.dynamic_rotate %312 by %c127_i32_106 dim 1 : vector<16x128xf32>, i32 -> vector<16x128xf32>
    %c32 = arith.constant 32 : index
    %353 = memref.load %arg1[%c32] : memref<98xf32, #tpu.memory_space<smem>>
    %c81 = arith.constant 81 : index
    %354 = memref.load %arg1[%c81] : memref<98xf32, #tpu.memory_space<smem>>
    %355 = vector.broadcast %353 : f32 to vector<16x128xf32>
    %356 = arith.mulf %355, %351 : vector<16x128xf32>
    %357 = vector.broadcast %354 : f32 to vector<16x128xf32>
    %358 = arith.mulf %357, %352 : vector<16x128xf32>
    %359 = arith.addf %356, %358 : vector<16x128xf32>
    %360 = arith.addf %350, %359 : vector<16x128xf32>
    %c126_i32_107 = arith.constant 126 : i32
    %361 = tpu.dynamic_rotate %310 by %c126_i32_107 dim 1 : vector<16x128xf32>, i32 -> vector<16x128xf32>
    %c126_i32_108 = arith.constant 126 : i32
    %362 = tpu.dynamic_rotate %312 by %c126_i32_108 dim 1 : vector<16x128xf32>, i32 -> vector<16x128xf32>
    %c33 = arith.constant 33 : index
    %363 = memref.load %arg1[%c33] : memref<98xf32, #tpu.memory_space<smem>>
    %c82 = arith.constant 82 : index
    %364 = memref.load %arg1[%c82] : memref<98xf32, #tpu.memory_space<smem>>
    %365 = vector.broadcast %363 : f32 to vector<16x128xf32>
    %366 = arith.mulf %365, %361 : vector<16x128xf32>
    %367 = vector.broadcast %364 : f32 to vector<16x128xf32>
    %368 = arith.mulf %367, %362 : vector<16x128xf32>
    %369 = arith.addf %366, %368 : vector<16x128xf32>
    %370 = arith.addf %360, %369 : vector<16x128xf32>
    %c125_i32_109 = arith.constant 125 : i32
    %371 = tpu.dynamic_rotate %310 by %c125_i32_109 dim 1 : vector<16x128xf32>, i32 -> vector<16x128xf32>
    %c125_i32_110 = arith.constant 125 : i32
    %372 = tpu.dynamic_rotate %312 by %c125_i32_110 dim 1 : vector<16x128xf32>, i32 -> vector<16x128xf32>
    %c34 = arith.constant 34 : index
    %373 = memref.load %arg1[%c34] : memref<98xf32, #tpu.memory_space<smem>>
    %c83 = arith.constant 83 : index
    %374 = memref.load %arg1[%c83] : memref<98xf32, #tpu.memory_space<smem>>
    %375 = vector.broadcast %373 : f32 to vector<16x128xf32>
    %376 = arith.mulf %375, %371 : vector<16x128xf32>
    %377 = vector.broadcast %374 : f32 to vector<16x128xf32>
    %378 = arith.mulf %377, %372 : vector<16x128xf32>
    %379 = arith.addf %376, %378 : vector<16x128xf32>
    %380 = arith.addf %370, %379 : vector<16x128xf32>
    %c0_111 = arith.constant 0 : index
    %c10_112 = arith.constant 10 : index
    %c0_113 = arith.constant 0 : index
    %381 = vector.load %arg5[%c0_111, %c10_112, %c0_113] : memref<2x32x128xf32, #tpu.memory_space<vmem>>, vector<1x16x128xf32>
    %382 = vector.shape_cast %381 : vector<1x16x128xf32> to vector<16x128xf32>
    %c1_114 = arith.constant 1 : index
    %c10_115 = arith.constant 10 : index
    %c0_116 = arith.constant 0 : index
    %383 = vector.load %arg5[%c1_114, %c10_115, %c0_116] : memref<2x32x128xf32, #tpu.memory_space<vmem>>, vector<1x16x128xf32>
    %384 = vector.shape_cast %383 : vector<1x16x128xf32> to vector<16x128xf32>
    %c3_i32_117 = arith.constant 3 : i32
    %385 = tpu.dynamic_rotate %382 by %c3_i32_117 dim 1 : vector<16x128xf32>, i32 -> vector<16x128xf32>
    %c3_i32_118 = arith.constant 3 : i32
    %386 = tpu.dynamic_rotate %384 by %c3_i32_118 dim 1 : vector<16x128xf32>, i32 -> vector<16x128xf32>
    %c35 = arith.constant 35 : index
    %387 = memref.load %arg1[%c35] : memref<98xf32, #tpu.memory_space<smem>>
    %c84 = arith.constant 84 : index
    %388 = memref.load %arg1[%c84] : memref<98xf32, #tpu.memory_space<smem>>
    %389 = vector.broadcast %387 : f32 to vector<16x128xf32>
    %390 = arith.mulf %389, %385 : vector<16x128xf32>
    %391 = vector.broadcast %388 : f32 to vector<16x128xf32>
    %392 = arith.mulf %391, %386 : vector<16x128xf32>
    %393 = arith.addf %390, %392 : vector<16x128xf32>
    %394 = arith.addf %380, %393 : vector<16x128xf32>
    %c2_i32_119 = arith.constant 2 : i32
    %395 = tpu.dynamic_rotate %382 by %c2_i32_119 dim 1 : vector<16x128xf32>, i32 -> vector<16x128xf32>
    %c2_i32_120 = arith.constant 2 : i32
    %396 = tpu.dynamic_rotate %384 by %c2_i32_120 dim 1 : vector<16x128xf32>, i32 -> vector<16x128xf32>
    %c36 = arith.constant 36 : index
    %397 = memref.load %arg1[%c36] : memref<98xf32, #tpu.memory_space<smem>>
    %c85 = arith.constant 85 : index
    %398 = memref.load %arg1[%c85] : memref<98xf32, #tpu.memory_space<smem>>
    %399 = vector.broadcast %397 : f32 to vector<16x128xf32>
    %400 = arith.mulf %399, %395 : vector<16x128xf32>
    %401 = vector.broadcast %398 : f32 to vector<16x128xf32>
    %402 = arith.mulf %401, %396 : vector<16x128xf32>
    %403 = arith.addf %400, %402 : vector<16x128xf32>
    %404 = arith.addf %394, %403 : vector<16x128xf32>
    %c1_i32_121 = arith.constant 1 : i32
    %405 = tpu.dynamic_rotate %382 by %c1_i32_121 dim 1 : vector<16x128xf32>, i32 -> vector<16x128xf32>
    %c1_i32_122 = arith.constant 1 : i32
    %406 = tpu.dynamic_rotate %384 by %c1_i32_122 dim 1 : vector<16x128xf32>, i32 -> vector<16x128xf32>
    %c37 = arith.constant 37 : index
    %407 = memref.load %arg1[%c37] : memref<98xf32, #tpu.memory_space<smem>>
    %c86 = arith.constant 86 : index
    %408 = memref.load %arg1[%c86] : memref<98xf32, #tpu.memory_space<smem>>
    %409 = vector.broadcast %407 : f32 to vector<16x128xf32>
    %410 = arith.mulf %409, %405 : vector<16x128xf32>
    %411 = vector.broadcast %408 : f32 to vector<16x128xf32>
    %412 = arith.mulf %411, %406 : vector<16x128xf32>
    %413 = arith.addf %410, %412 : vector<16x128xf32>
    %414 = arith.addf %404, %413 : vector<16x128xf32>
    %c38 = arith.constant 38 : index
    %415 = memref.load %arg1[%c38] : memref<98xf32, #tpu.memory_space<smem>>
    %c87 = arith.constant 87 : index
    %416 = memref.load %arg1[%c87] : memref<98xf32, #tpu.memory_space<smem>>
    %417 = vector.broadcast %415 : f32 to vector<16x128xf32>
    %418 = arith.mulf %417, %382 : vector<16x128xf32>
    %419 = vector.broadcast %416 : f32 to vector<16x128xf32>
    %420 = arith.mulf %419, %384 : vector<16x128xf32>
    %421 = arith.addf %418, %420 : vector<16x128xf32>
    %422 = arith.addf %414, %421 : vector<16x128xf32>
    %c127_i32_123 = arith.constant 127 : i32
    %423 = tpu.dynamic_rotate %382 by %c127_i32_123 dim 1 : vector<16x128xf32>, i32 -> vector<16x128xf32>
    %c127_i32_124 = arith.constant 127 : i32
    %424 = tpu.dynamic_rotate %384 by %c127_i32_124 dim 1 : vector<16x128xf32>, i32 -> vector<16x128xf32>
    %c39 = arith.constant 39 : index
    %425 = memref.load %arg1[%c39] : memref<98xf32, #tpu.memory_space<smem>>
    %c88 = arith.constant 88 : index
    %426 = memref.load %arg1[%c88] : memref<98xf32, #tpu.memory_space<smem>>
    %427 = vector.broadcast %425 : f32 to vector<16x128xf32>
    %428 = arith.mulf %427, %423 : vector<16x128xf32>
    %429 = vector.broadcast %426 : f32 to vector<16x128xf32>
    %430 = arith.mulf %429, %424 : vector<16x128xf32>
    %431 = arith.addf %428, %430 : vector<16x128xf32>
    %432 = arith.addf %422, %431 : vector<16x128xf32>
    %c126_i32_125 = arith.constant 126 : i32
    %433 = tpu.dynamic_rotate %382 by %c126_i32_125 dim 1 : vector<16x128xf32>, i32 -> vector<16x128xf32>
    %c126_i32_126 = arith.constant 126 : i32
    %434 = tpu.dynamic_rotate %384 by %c126_i32_126 dim 1 : vector<16x128xf32>, i32 -> vector<16x128xf32>
    %c40 = arith.constant 40 : index
    %435 = memref.load %arg1[%c40] : memref<98xf32, #tpu.memory_space<smem>>
    %c89 = arith.constant 89 : index
    %436 = memref.load %arg1[%c89] : memref<98xf32, #tpu.memory_space<smem>>
    %437 = vector.broadcast %435 : f32 to vector<16x128xf32>
    %438 = arith.mulf %437, %433 : vector<16x128xf32>
    %439 = vector.broadcast %436 : f32 to vector<16x128xf32>
    %440 = arith.mulf %439, %434 : vector<16x128xf32>
    %441 = arith.addf %438, %440 : vector<16x128xf32>
    %442 = arith.addf %432, %441 : vector<16x128xf32>
    %c125_i32_127 = arith.constant 125 : i32
    %443 = tpu.dynamic_rotate %382 by %c125_i32_127 dim 1 : vector<16x128xf32>, i32 -> vector<16x128xf32>
    %c125_i32_128 = arith.constant 125 : i32
    %444 = tpu.dynamic_rotate %384 by %c125_i32_128 dim 1 : vector<16x128xf32>, i32 -> vector<16x128xf32>
    %c41 = arith.constant 41 : index
    %445 = memref.load %arg1[%c41] : memref<98xf32, #tpu.memory_space<smem>>
    %c90 = arith.constant 90 : index
    %446 = memref.load %arg1[%c90] : memref<98xf32, #tpu.memory_space<smem>>
    %447 = vector.broadcast %445 : f32 to vector<16x128xf32>
    %448 = arith.mulf %447, %443 : vector<16x128xf32>
    %449 = vector.broadcast %446 : f32 to vector<16x128xf32>
    %450 = arith.mulf %449, %444 : vector<16x128xf32>
    %451 = arith.addf %448, %450 : vector<16x128xf32>
    %452 = arith.addf %442, %451 : vector<16x128xf32>
    %c0_129 = arith.constant 0 : index
    %c11_130 = arith.constant 11 : index
    %c0_131 = arith.constant 0 : index
    %453 = vector.load %arg5[%c0_129, %c11_130, %c0_131] : memref<2x32x128xf32, #tpu.memory_space<vmem>>, vector<1x16x128xf32>
    %454 = vector.shape_cast %453 : vector<1x16x128xf32> to vector<16x128xf32>
    %c1_132 = arith.constant 1 : index
    %c11_133 = arith.constant 11 : index
    %c0_134 = arith.constant 0 : index
    %455 = vector.load %arg5[%c1_132, %c11_133, %c0_134] : memref<2x32x128xf32, #tpu.memory_space<vmem>>, vector<1x16x128xf32>
    %456 = vector.shape_cast %455 : vector<1x16x128xf32> to vector<16x128xf32>
    %c3_i32_135 = arith.constant 3 : i32
    %457 = tpu.dynamic_rotate %454 by %c3_i32_135 dim 1 : vector<16x128xf32>, i32 -> vector<16x128xf32>
    %c3_i32_136 = arith.constant 3 : i32
    %458 = tpu.dynamic_rotate %456 by %c3_i32_136 dim 1 : vector<16x128xf32>, i32 -> vector<16x128xf32>
    %c42 = arith.constant 42 : index
    %459 = memref.load %arg1[%c42] : memref<98xf32, #tpu.memory_space<smem>>
    %c91 = arith.constant 91 : index
    %460 = memref.load %arg1[%c91] : memref<98xf32, #tpu.memory_space<smem>>
    %461 = vector.broadcast %459 : f32 to vector<16x128xf32>
    %462 = arith.mulf %461, %457 : vector<16x128xf32>
    %463 = vector.broadcast %460 : f32 to vector<16x128xf32>
    %464 = arith.mulf %463, %458 : vector<16x128xf32>
    %465 = arith.addf %462, %464 : vector<16x128xf32>
    %466 = arith.addf %452, %465 : vector<16x128xf32>
    %c2_i32_137 = arith.constant 2 : i32
    %467 = tpu.dynamic_rotate %454 by %c2_i32_137 dim 1 : vector<16x128xf32>, i32 -> vector<16x128xf32>
    %c2_i32_138 = arith.constant 2 : i32
    %468 = tpu.dynamic_rotate %456 by %c2_i32_138 dim 1 : vector<16x128xf32>, i32 -> vector<16x128xf32>
    %c43 = arith.constant 43 : index
    %469 = memref.load %arg1[%c43] : memref<98xf32, #tpu.memory_space<smem>>
    %c92 = arith.constant 92 : index
    %470 = memref.load %arg1[%c92] : memref<98xf32, #tpu.memory_space<smem>>
    %471 = vector.broadcast %469 : f32 to vector<16x128xf32>
    %472 = arith.mulf %471, %467 : vector<16x128xf32>
    %473 = vector.broadcast %470 : f32 to vector<16x128xf32>
    %474 = arith.mulf %473, %468 : vector<16x128xf32>
    %475 = arith.addf %472, %474 : vector<16x128xf32>
    %476 = arith.addf %466, %475 : vector<16x128xf32>
    %c1_i32_139 = arith.constant 1 : i32
    %477 = tpu.dynamic_rotate %454 by %c1_i32_139 dim 1 : vector<16x128xf32>, i32 -> vector<16x128xf32>
    %c1_i32_140 = arith.constant 1 : i32
    %478 = tpu.dynamic_rotate %456 by %c1_i32_140 dim 1 : vector<16x128xf32>, i32 -> vector<16x128xf32>
    %c44 = arith.constant 44 : index
    %479 = memref.load %arg1[%c44] : memref<98xf32, #tpu.memory_space<smem>>
    %c93 = arith.constant 93 : index
    %480 = memref.load %arg1[%c93] : memref<98xf32, #tpu.memory_space<smem>>
    %481 = vector.broadcast %479 : f32 to vector<16x128xf32>
    %482 = arith.mulf %481, %477 : vector<16x128xf32>
    %483 = vector.broadcast %480 : f32 to vector<16x128xf32>
    %484 = arith.mulf %483, %478 : vector<16x128xf32>
    %485 = arith.addf %482, %484 : vector<16x128xf32>
    %486 = arith.addf %476, %485 : vector<16x128xf32>
    %c45 = arith.constant 45 : index
    %487 = memref.load %arg1[%c45] : memref<98xf32, #tpu.memory_space<smem>>
    %c94 = arith.constant 94 : index
    %488 = memref.load %arg1[%c94] : memref<98xf32, #tpu.memory_space<smem>>
    %489 = vector.broadcast %487 : f32 to vector<16x128xf32>
    %490 = arith.mulf %489, %454 : vector<16x128xf32>
    %491 = vector.broadcast %488 : f32 to vector<16x128xf32>
    %492 = arith.mulf %491, %456 : vector<16x128xf32>
    %493 = arith.addf %490, %492 : vector<16x128xf32>
    %494 = arith.addf %486, %493 : vector<16x128xf32>
    %c127_i32_141 = arith.constant 127 : i32
    %495 = tpu.dynamic_rotate %454 by %c127_i32_141 dim 1 : vector<16x128xf32>, i32 -> vector<16x128xf32>
    %c127_i32_142 = arith.constant 127 : i32
    %496 = tpu.dynamic_rotate %456 by %c127_i32_142 dim 1 : vector<16x128xf32>, i32 -> vector<16x128xf32>
    %c46 = arith.constant 46 : index
    %497 = memref.load %arg1[%c46] : memref<98xf32, #tpu.memory_space<smem>>
    %c95 = arith.constant 95 : index
    %498 = memref.load %arg1[%c95] : memref<98xf32, #tpu.memory_space<smem>>
    %499 = vector.broadcast %497 : f32 to vector<16x128xf32>
    %500 = arith.mulf %499, %495 : vector<16x128xf32>
    %501 = vector.broadcast %498 : f32 to vector<16x128xf32>
    %502 = arith.mulf %501, %496 : vector<16x128xf32>
    %503 = arith.addf %500, %502 : vector<16x128xf32>
    %504 = arith.addf %494, %503 : vector<16x128xf32>
    %c126_i32_143 = arith.constant 126 : i32
    %505 = tpu.dynamic_rotate %454 by %c126_i32_143 dim 1 : vector<16x128xf32>, i32 -> vector<16x128xf32>
    %c126_i32_144 = arith.constant 126 : i32
    %506 = tpu.dynamic_rotate %456 by %c126_i32_144 dim 1 : vector<16x128xf32>, i32 -> vector<16x128xf32>
    %c47 = arith.constant 47 : index
    %507 = memref.load %arg1[%c47] : memref<98xf32, #tpu.memory_space<smem>>
    %c96 = arith.constant 96 : index
    %508 = memref.load %arg1[%c96] : memref<98xf32, #tpu.memory_space<smem>>
    %509 = vector.broadcast %507 : f32 to vector<16x128xf32>
    %510 = arith.mulf %509, %505 : vector<16x128xf32>
    %511 = vector.broadcast %508 : f32 to vector<16x128xf32>
    %512 = arith.mulf %511, %506 : vector<16x128xf32>
    %513 = arith.addf %510, %512 : vector<16x128xf32>
    %514 = arith.addf %504, %513 : vector<16x128xf32>
    %c125_i32_145 = arith.constant 125 : i32
    %515 = tpu.dynamic_rotate %454 by %c125_i32_145 dim 1 : vector<16x128xf32>, i32 -> vector<16x128xf32>
    %c125_i32_146 = arith.constant 125 : i32
    %516 = tpu.dynamic_rotate %456 by %c125_i32_146 dim 1 : vector<16x128xf32>, i32 -> vector<16x128xf32>
    %c48 = arith.constant 48 : index
    %517 = memref.load %arg1[%c48] : memref<98xf32, #tpu.memory_space<smem>>
    %c97 = arith.constant 97 : index
    %518 = memref.load %arg1[%c97] : memref<98xf32, #tpu.memory_space<smem>>
    %519 = vector.broadcast %517 : f32 to vector<16x128xf32>
    %520 = arith.mulf %519, %515 : vector<16x128xf32>
    %521 = vector.broadcast %518 : f32 to vector<16x128xf32>
    %522 = arith.mulf %521, %516 : vector<16x128xf32>
    %523 = arith.addf %520, %522 : vector<16x128xf32>
    %524 = arith.addf %514, %523 : vector<16x128xf32>
    %525 = vector.extract_strided_slice %524 {offsets = [0, 0], sizes = [16, 16], strides = [1, 1]} : vector<16x128xf32> to vector<16x16xf32>
    %526 = arith.negf %525 : vector<16x16xf32>
    %527 = math.exp %526 : vector<16x16xf32>
    %cst_147 = arith.constant 1.000000e+00 : f32
    %528 = vector.broadcast %cst_147 : f32 to vector<16x16xf32>
    %529 = arith.addf %528, %527 : vector<16x16xf32>
    %530 = arith.divf %528, %529 : vector<16x16xf32>
    %531 = arith.index_cast %9 : i32 to index
    %c0_148 = arith.constant 0 : index
    %c0_149 = arith.constant 0 : index
    %c0_150 = arith.constant 0 : index
    %532 = vector.load %arg4[%531, %c0_148, %c0_149, %c0_150] : memref<1x1x16x16xf32, #tpu.memory_space<vmem>>, vector<1x1x16x16xf32>
    %533 = vector.shape_cast %532 : vector<1x1x16x16xf32> to vector<16x16xf32>
    %534 = vector.shape_cast %530 : vector<16x16xf32> to vector<1x1x16x16xf32>
    tpu.vector_store %arg4[%531, %c0_148, %c0_149, %c0_150], %534 {strides = array<i32>} : memref<1x1x16x16xf32, #tpu.memory_space<vmem>>, vector<1x1x16x16xf32>,
    %c1_i32_151 = arith.constant 1 : i32
    return
  }
  func.func @transform_0(%arg0: i32) -> i32 {
    %c0_i32 = arith.constant 0 : i32
    %c0_i32_0 = arith.constant 0 : i32
    return %c0_i32 : i32
  }
  func.func @transform_1(%arg0: i32) -> i32 {
    %c0_i32 = arith.constant 0 : i32
    %c0_i32_0 = arith.constant 0 : i32
    return %c0_i32 : i32
  }
  func.func @transform_2(%arg0: i32) -> (i32, i32, i32, i32) {
    %c0_i32 = arith.constant 0 : i32
    %c0_i32_0 = arith.constant 0 : i32
    %c0_i32_1 = arith.constant 0 : i32
    %c0_i32_2 = arith.constant 0 : i32
    return %arg0, %c0_i32, %c0_i32_0, %c0_i32_1 : i32, i32, i32, i32
  }
  func.func @transform_3(%arg0: i32) -> (i32, i32, i32, i32) {
    %c0_i32 = arith.constant 0 : i32
    %c0_i32_0 = arith.constant 0 : i32
    %c0_i32_1 = arith.constant 0 : i32
    %c0_i32_2 = arith.constant 0 : i32
    return %arg0, %c0_i32, %c0_i32_0, %c0_i32_1 : i32, i32, i32, i32
  }
}

</mosaic_0001>

<llo_original>
// kernel: tpu_custom_call.1
$region0: #{tpu_custom_call.1}
  #allocation0 [shape = 'u32[]', space=smem, size = 0x4, offset = 0x4, fixed_abs, tag = 'smem constant byte address 0x4 - core index']
  #allocation1 [shape = 'u32[144,128]{1,0:T(1,128)}', space=vmem, size = 0x12000, scoped, tag = 'internal scratch']
  #allocation2 [shape = 'f32[2,32,128]{2,1,0:T(8,128)}', space=vmem, size = 0x8000, scoped, tag = 'scratch operand']
  #allocation3 [shape = 'f32[1]{0:T(128)S(6)}', space=smem, size = 0x200, scoped, tag = 'scoped memory for tpu_custom_call.1']
  %s0 = inlined_call_operand.vmem [shape: f32[98], index: 0, kind: input, shape index: {}]
  %s1 = inlined_call_operand.<no memory space> [shape: f32[1], index: 1, kind: input, shape index: {}]
  %s2 = inlined_call_operand.hbm [shape: f32[2,4,16,16], index: 2, kind: input, shape index: {}]
  %s3 = inlined_call_operand.hbm [shape: f32[2,1,16,16], index: 3, kind: output, shape index: {}]
  %s4 = sld [smem:[#allocation0]]
  $region60: #{tpu_custom_call.1} parent=0
    _
  %s6 = ssub.s32 1, %s4
  %s7 = scalar_select 0, %s6, %s4
  %8 = sst [smem:[#allocation3]] %s1
  $region1: #{tpu_custom_call.1} parent=0
    #allocation4 [shape = 'u8[512]{0}', space=smem, size = 0x200, scoped, tag = 'input window, operand 0, single buffered']
    #allocation5 [shape = 's32[2]{0}', space=sflag, size = 0x8, scoped, tag = 'scoped memory for tpu_custom_call.1']
    #allocation6 [shape = 's32[2]{0}', space=sflag, size = 0x8, scoped, tag = 'scoped memory for tpu_custom_call.1']
    #allocation7 [shape = 's32[2]{0}', space=sflag, size = 0x8, scoped, tag = 'scoped memory for tpu_custom_call.1']
    #allocation8 [shape = 'u8[65536]{0}', space=vmem, size = 0x10000, scoped, tag = 'input window, operand 2']
    #allocation9 [shape = 'u8[16384]{0}', space=vmem, size = 0x4000, scoped, tag = 'output window, operand 0']
    %9 = vsyncpa [#allocation7], 0
    %10 = vsyncpa [#allocation5], 0
    %s11 = scalar_lea.sflag [#allocation5], 1
    %12 = vsyncpa %s11, 0
    %13 = vsyncpa [#allocation6], 0
    %s14 = scalar_lea.sflag [#allocation6], 1
    %15 = vsyncpa %s14, 0
    loop: start=0, step=1, limit=4
    $region2: #{tpu_custom_call.1} parent=1 // loop_pre_header
      _
    $region3: #{tpu_custom_call.1} parent=1 // loop_header
      %s17 = sphi 0, %s21
      %p18 = scmp.ge.s32.totalorder %s17, 4
      %s25 = sphi 0, %s25
      %s27 = sphi 0, %s25
      %s28 = sphi 0, %s27
      %s42 = sphi 0, %s28
      %s46 = sphi 0, %s46
      %s48 = sphi 0, %s46
      %s49 = sphi 0, %s48
      %s63 = sphi 0, %s49
      %s69 = sphi 0, %s71
      %s72 = sphi 0, %s69
      %s73 = sphi 0, %s72
      %s89 = sphi 0, %s73
      %s95 = sphi 0, %s97
      %s98 = sphi 0, %s95
      %s99 = sphi 0, %s98
      %s115 = sphi 0, %s99
    $region4: #{tpu_custom_call.1} parent=1 // loop_header_branch
      %20 = sbr.rel (%p18) target = $region8
    $region5: #{tpu_custom_call.1} parent=1 // loop_body
      %s22 = ssub.s32 %s17, 1
      %s23 = ssub.s32 %s17, 2
      %s24 = sadd.s32 %s17, 1
      %s26 = sadd.s32 %s25, 1
      %p29 = scmp.eq.s32.totalorder %s17, 1
      %p30 = scmp.ne.s32.totalorder %s25, %s27
      %p31 = scmp.eq.s32.totalorder %s17, 0
      %p32 = por %p30, %p31
      %p33 = scmp.ne.s32.totalorder %s25, %s27
      %p34 = scmp.eq.s32.totalorder %s22, 1
      %p35 = por %p33, %p34
      %p36 = scmp.ne.s32.totalorder %s27, %s28
      %p37 = scmp.eq.s32.totalorder %s22, 0
      %p38 = por %p36, %p37
      %p39 = scmp.ne.s32.totalorder %s27, %s28
      %p40 = scmp.eq.s32.totalorder %s23, 1
      %p41 = por %p39, %p40
      %p43 = scmp.ne.s32.totalorder %s28, %s42
      %p44 = scmp.eq.s32.totalorder %s23, 0
      %p45 = por %p43, %p44
      %s47 = sadd.s32 %s46, 1
      %p50 = scmp.eq.s32.totalorder %s17, 1
      %p51 = scmp.ne.s32.totalorder %s46, %s48
      %p52 = scmp.eq.s32.totalorder %s17, 0
      %p53 = por %p51, %p52
      %p54 = scmp.ne.s32.totalorder %s46, %s48
      %p55 = scmp.eq.s32.totalorder %s22, 1
      %p56 = por %p54, %p55
      %p57 = scmp.ne.s32.totalorder %s48, %s49
      %p58 = scmp.eq.s32.totalorder %s22, 0
      %p59 = por %p57, %p58
      %p60 = scmp.ne.s32.totalorder %s48, %s49
      %p61 = scmp.eq.s32.totalorder %s23, 1
      %p62 = por %p60, %p61
      %p64 = scmp.ne.s32.totalorder %s49, %s63
      %p65 = scmp.eq.s32.totalorder %s23, 0
      %p66 = por %p64, %p65
      %s67 = ssub.s32 %s17, %s24
      %p68 = scmp.eq.s32.totalorder %s67, 0
      %s70 = sadd.s32 %s69, 1
      %s71 = scalar_select %p68, %s69, %s70
      %p74 = pneg %p68
      %p75 = scmp.eq.s32.totalorder %s17, 1
      %p76 = por %p74, %p75
      %p77 = scmp.ne.s32.totalorder %s69, %s72
      %p78 = scmp.eq.s32.totalorder %s17, 0
      %p79 = por %p77, %p78
      %p80 = scmp.ne.s32.totalorder %s69, %s72
      %p81 = scmp.eq.s32.totalorder %s22, 1
      %p82 = por %p80, %p81
      %p83 = scmp.ne.s32.totalorder %s72, %s73
      %p84 = scmp.eq.s32.totalorder %s22, 0
      %p85 = por %p83, %p84
      %p86 = scmp.ne.s32.totalorder %s72, %s73
      %p87 = scmp.eq.s32.totalorder %s23, 1
      %p88 = por %p86, %p87
      %p90 = scmp.ne.s32.totalorder %s73, %s89
      %p91 = scmp.eq.s32.totalorder %s23, 0
      %p92 = por %p90, %p91
      %s93 = ssub.s32 %s17, %s24
      %p94 = scmp.eq.s32.totalorder %s93, 0
      %s96 = sadd.s32 %s95, 1
      %s97 = scalar_select %p94, %s95, %s96
      %p100 = pneg %p94
      %p101 = scmp.eq.s32.totalorder %s17, 1
      %p102 = por %p100, %p101
      %p103 = scmp.ne.s32.totalorder %s95, %s98
      %p104 = scmp.eq.s32.totalorder %s17, 0
      %p105 = por %p103, %p104
      %p106 = scmp.ne.s32.totalorder %s95, %s98
      %p107 = scmp.eq.s32.totalorder %s22, 1
      %p108 = por %p106, %p107
      %p109 = scmp.ne.s32.totalorder %s98, %s99
      %p110 = scmp.eq.s32.totalorder %s22, 0
      %p111 = por %p109, %p110
      %p112 = scmp.ne.s32.totalorder %s98, %s99
      %p113 = scmp.eq.s32.totalorder %s23, 1
      %p114 = por %p112, %p113
      %p116 = scmp.ne.s32.totalorder %s99, %s115
      %p117 = scmp.eq.s32.totalorder %s23, 0
      %p118 = por %p116, %p117
      %p119 = scmp.le.s32.totalorder 1, %s17
      %p120 = scmp.lt.s32.totalorder %s17, 3
      %p121 = pnand %p119, %p120
      %p122 = pneg %p121
      // Predicated region
      $region9: #{tpu_custom_call.1} parent=5 // pred_check
        _
      $region10: #{tpu_custom_call.1} parent=5 // pred_check_branch
        %124 = sbr.rel (%p121) target = $region12
      $region11: #{tpu_custom_call.1} parent=5 // pred_region
        %s125 = ssub.s32 %s17, 1
        // Predicated region
        $region13: #{tpu_custom_call.1} parent=11 // pred_check
          %p126 = pneg %p38
        $region14: #{tpu_custom_call.1} parent=11 // pred_check_branch
          %128 = sbr.rel (%p126) target = $region16
        $region15: #{tpu_custom_call.1} parent=11 // pred_region
          %s130 = ssub.s32 16, 16
          %131 = vsyncadd [#allocation7], %s130
          %s133 = sshll.u32 %s0, 4
          %s134 = int_to_ptr.vmem [resolvable:$true] %s133
          %136 = dma.vmem_to_smem %s134, 16, [#allocation4], [#allocation7]
        $region16: #{tpu_custom_call.1} parent=11 // pred_fallthru
          _
        // Predicated region
        $region17: #{tpu_custom_call.1} parent=11 // pred_check
          %p137 = pneg %p59
        $region18: #{tpu_custom_call.1} parent=11 // pred_check_branch
          %139 = sbr.rel (%p137) target = $region20
        $region19: #{tpu_custom_call.1} parent=11 // pred_region
          _
        $region20: #{tpu_custom_call.1} parent=11 // pred_fallthru
          _
      $region12: #{tpu_custom_call.1} parent=5 // pred_fallthru
        _
      %p140 = scmp.lt.s32.totalorder %s17, 2
      // Predicated region
      $region21: #{tpu_custom_call.1} parent=5 // pred_check
        %p141 = pneg %p140
      $region22: #{tpu_custom_call.1} parent=5 // pred_check_branch
        %143 = sbr.rel (%p141) target = $region24
      $region23: #{tpu_custom_call.1} parent=5 // pred_region
        // Predicated region
        $region25: #{tpu_custom_call.1} parent=23 // pred_check
          %p144 = pneg %p79
        $region26: #{tpu_custom_call.1} parent=23 // pred_check_branch
          %146 = sbr.rel (%p144) target = $region28
        $region27: #{tpu_custom_call.1} parent=23 // pred_region
          %s147 = sand.u32 %s69, 1
          %s148 = scalar_lea.sflag [#allocation5], %s147
          %s149 = sand.u32 %s69, 1
          %s150 = smul.addr %s149, 64
          %s151 = scalar_lea.vmem [#allocation8], %s150
          %s153 = ssub.s32 1024, 1024
          %154 = vsyncadd %s148, %s153
          %s155 = smul.addr %s17, 8
          %s156 = smul.addr %s155, 128
          %s157 = scalar_lea.hbm %s2, %s156
          %s158 = sshll.u32 %s151, 4
          %s159 = int_to_ptr.vmem [resolvable:$true] %s158
          %164 = dma.hbm_to_vmem [thread:$0]  %s157, 1024, %s159, %s148, 128, 128, 8
        $region28: #{tpu_custom_call.1} parent=23 // pred_fallthru
          _
      $region24: #{tpu_custom_call.1} parent=5 // pred_fallthru
        _
      %p165 = scmp.le.s32.totalorder 1, %s17
      %p166 = scmp.lt.s32.totalorder %s17, 3
      %p167 = pnand %p165, %p166
      %p168 = pneg %p167
      // Predicated region
      $region29: #{tpu_custom_call.1} parent=5 // pred_check
        _
      $region30: #{tpu_custom_call.1} parent=5 // pred_check_branch
        %170 = sbr.rel (%p167) target = $region32
      $region31: #{tpu_custom_call.1} parent=5 // pred_region
        %s171 = ssub.s32 %s17, 1
        // Predicated region
        $region33: #{tpu_custom_call.1} parent=31 // pred_check
          %p172 = pneg %p38
        $region34: #{tpu_custom_call.1} parent=31 // pred_check_branch
          %174 = sbr.rel (%p172) target = $region36
        $region35: #{tpu_custom_call.1} parent=31 // pred_region
          %175 = dma.done [#allocation7], 16
        $region36: #{tpu_custom_call.1} parent=31 // pred_fallthru
          _
        %s176 = sand.u32 %s72, 1
        %s177 = scalar_lea.sflag [#allocation5], %s176
        %s178 = sand.u32 %s72, 1
        %s179 = smul.addr %s178, 64
        %s180 = scalar_lea.vmem [#allocation8], %s179
        // Predicated region
        $region37: #{tpu_custom_call.1} parent=31 // pred_check
          %p181 = pneg %p85
        $region38: #{tpu_custom_call.1} parent=31 // pred_check_branch
          %183 = sbr.rel (%p181) target = $region40
        $region39: #{tpu_custom_call.1} parent=31 // pred_region
          %184 = dma.done %s177, 1024
        $region40: #{tpu_custom_call.1} parent=31 // pred_fallthru
          _
        %185 = sfence
        %p186 = pneg %p38
        %p187 = pneg %p35
        %p188 = pneg %p59
        %p189 = pneg %p56
        %s190 = sand.u32 %s72, 1
        %s191 = scalar_lea.sflag [#allocation5], %s190
        %s192 = sand.u32 %s72, 1
        %s193 = smul.addr %s192, 64
        %s194 = scalar_lea.vmem [#allocation8], %s193
        %p195 = pneg %p85
        %p196 = pneg %p82
        %p197 = pneg %p111
        %p198 = pneg %p108
        %s199 = sand.u32 %s98, 1
        %s200 = scalar_lea.sflag [#allocation6], %s199
        %s201 = sand.u32 %s98, 1
        %s202 = smul.addr %s201, 16
        %s203 = scalar_lea.vmem [#allocation9], %s202
        %204 = vst [vmem:[#allocation2] sm:$0xff] 0.0
        %205 = vst [vmem:[#allocation2 + $0x20] sm:$0xff] 0.0
        %206 = vst [vmem:[#allocation2 + $0x18] sm:$0xff] 0.0
        %207 = vst [vmem:[#allocation2 + $0x38] sm:$0xff] 0.0
        %vm208 = vcmask 1047680
        %209 = vst.msk [vmem:[#allocation2 + $0x8] sm:$0xff] %vm208, 0.0
        %210 = vst.msk [vmem:[#allocation2 + $0x10] sm:$0xff] %vm208, 0.0
        %211 = vst.msk [vmem:[#allocation2 + $0x28] sm:$0xff] %vm208, 0.0
        %212 = vst.msk [vmem:[#allocation2 + $0x30] sm:$0xff] %vm208, 0.0
        %s213 = sld [smem:[#allocation3]]
        %v214 = vstv %s213
        %v215 = vld [vmem:[%s180] sm:$0xff]
        %v216 = vld [vmem:[%s180 + $0x8] sm:$0xff]
        loop: start=1, step=1, limit=4
        $region41: #{tpu_custom_call.1} parent=31 // loop_pre_header
          _
        $region42: #{tpu_custom_call.1} parent=31 // loop_header
          %s218 = sphi 1, %s222
          %p219 = scmp.ge.s32.totalorder %s218, 4
          %v223 = vphi %v215, %v231
          %v224 = vphi %v216, %v232
          %v225 = vphi %v215, %v233
          %v226 = vphi %v216, %v234
        $region43: #{tpu_custom_call.1} parent=31 // loop_header_branch
          %221 = sbr.rel (%p219) target = $region47
        $region44: #{tpu_custom_call.1} parent=31 // loop_body
          %s227 = smul.u32 %s218, 16
          %s228 = scalar_lea.vmem %s180, %s227 [#allocation8]
          %v229 = vld [vmem:[%s228] sm:$0xff]
          %v230 = vld [vmem:[%s228 + $0x8] sm:$0xff]
          %v231 = vadd.f32 %v223, %v229
          %v232 = vadd.f32 %v224, %v230
          %v233 = vmax.f32 %v225, %v229
          %v234 = vmax.f32 %v226, %v230
        $region45: #{tpu_custom_call.1} parent=31 // loop_footer
          %s222 = sadd.s32 1, %s218
        $region46: #{tpu_custom_call.1} parent=31 // loop_footer_branch
          %217 = sbr.rel target = $region42
        $region47: #{tpu_custom_call.1} parent=31 // loop_exit
          _
        %vm235 = vcmask 130048
        %236 = vst.msk [vmem:[#allocation2 + $0x8] sm:$0xff] %vm235, %v223
        %237 = vst.msk [vmem:[#allocation2 + $0x10] sm:$0xff] %vm235, %v224
        %s238 = scalar_lea.vmem [#allocation2], 32
        %239 = vst.msk [vmem:[%s238 + $0x8] sm:$0xff] %vm235, %v225
        %240 = vst.msk [vmem:[%s238 + $0x10] sm:$0xff] %vm235, %v226
        %v241 = vld [vmem:[#allocation2 + $0x5] sm:$0xff]
        %v242 = vld [vmem:[#allocation2 + $0xd] sm:$0xff]
        %v243 = vld [vmem:[%s238 + $0x5] sm:$0xff]
        %v244 = vld [vmem:[%s238 + $0xd] sm:$0xff]
        %245 = vrot.lane.b32.xlu0 %v241, 3
        %v246 = vpop.permute.xlu0 %245
        %247 = vrot.lane.b32.xlu0 %v242, 3
        %v248 = vpop.permute.xlu0 %247
        %249 = vrot.lane.b32.xlu0 %v243, 3
        %v250 = vpop.permute.xlu0 %249
        %251 = vrot.lane.b32.xlu0 %v244, 3
        %v252 = vpop.permute.xlu0 %251
        %s253 = sld [smem:[#allocation4]]
        %s254 = sld [smem:[#allocation4 + $0x31]]
        %v255 = vstv %s253
        %v256 = vmul.f32 %v255, %v246
        %v257 = vmul.f32 %v255, %v248
        %v258 = vstv %s254
        %v259 = vmul.f32 %v258, %v250
        %v260 = vmul.f32 %v258, %v252
        %v261 = vadd.f32 %v256, %v259
        %v262 = vadd.f32 %v257, %v260
        %v263 = vadd.f32 %v214, %v261
        %v264 = vadd.f32 %v214, %v262
        %265 = vrot.lane.b32.xlu0 %v241, 2
        %v266 = vpop.permute.xlu0 %265
        %267 = vrot.lane.b32.xlu0 %v242, 2
        %v268 = vpop.permute.xlu0 %267
        %269 = vrot.lane.b32.xlu0 %v243, 2
        %v270 = vpop.permute.xlu0 %269
        %271 = vrot.lane.b32.xlu0 %v244, 2
        %v272 = vpop.permute.xlu0 %271
        %s273 = sld [smem:[#allocation4 + $0x1]]
        %s274 = sld [smem:[#allocation4 + $0x32]]
        %v275 = vstv %s273
        %v276 = vmul.f32 %v275, %v266
        %v277 = vmul.f32 %v275, %v268
        %v278 = vstv %s274
        %v279 = vmul.f32 %v278, %v270
        %v280 = vmul.f32 %v278, %v272
        %v281 = vadd.f32 %v276, %v279
        %v282 = vadd.f32 %v277, %v280
        %v283 = vadd.f32 %v263, %v281
        %v284 = vadd.f32 %v264, %v282
        %285 = vrot.lane.b32.xlu0 %v241, 1
        %v286 = vpop.permute.xlu0 %285
        %287 = vrot.lane.b32.xlu0 %v242, 1
        %v288 = vpop.permute.xlu0 %287
        %289 = vrot.lane.b32.xlu0 %v243, 1
        %v290 = vpop.permute.xlu0 %289
        %291 = vrot.lane.b32.xlu0 %v244, 1
        %v292 = vpop.permute.xlu0 %291
        %s293 = sld [smem:[#allocation4 + $0x2]]
        %s294 = sld [smem:[#allocation4 + $0x33]]
        %v295 = vstv %s293
        %v296 = vmul.f32 %v295, %v286
        %v297 = vmul.f32 %v295, %v288
        %v298 = vstv %s294
        %v299 = vmul.f32 %v298, %v290
        %v300 = vmul.f32 %v298, %v292
        %v301 = vadd.f32 %v296, %v299
        %v302 = vadd.f32 %v297, %v300
        %v303 = vadd.f32 %v283, %v301
        %v304 = vadd.f32 %v284, %v302
        %s305 = sld [smem:[#allocation4 + $0x3]]
        %s306 = sld [smem:[#allocation4 + $0x34]]
        %v307 = vstv %s305
        %v308 = vmul.f32 %v307, %v241
        %v309 = vmul.f32 %v307, %v242
        %v310 = vstv %s306
        %v311 = vmul.f32 %v310, %v243
        %v312 = vmul.f32 %v310, %v244
        %v313 = vadd.f32 %v308, %v311
        %v314 = vadd.f32 %v309, %v312
        %v315 = vadd.f32 %v303, %v313
        %v316 = vadd.f32 %v304, %v314
        %317 = vrot.lane.b32.xlu0 %v241, 127
        %v318 = vpop.permute.xlu0 %317
        %319 = vrot.lane.b32.xlu0 %v242, 127
        %v320 = vpop.permute.xlu0 %319
        %321 = vrot.lane.b32.xlu0 %v243, 127
        %v322 = vpop.permute.xlu0 %321
        %323 = vrot.lane.b32.xlu0 %v244, 127
        %v324 = vpop.permute.xlu0 %323
        %s325 = sld [smem:[#allocation4 + $0x4]]
        %s326 = sld [smem:[#allocation4 + $0x35]]
        %v327 = vstv %s325
        %v328 = vmul.f32 %v327, %v318
        %v329 = vmul.f32 %v327, %v320
        %v330 = vstv %s326
        %v331 = vmul.f32 %v330, %v322
        %v332 = vmul.f32 %v330, %v324
        %v333 = vadd.f32 %v328, %v331
        %v334 = vadd.f32 %v329, %v332
        %v335 = vadd.f32 %v315, %v333
        %v336 = vadd.f32 %v316, %v334
        %337 = vrot.lane.b32.xlu0 %v241, 126
        %v338 = vpop.permute.xlu0 %337
        %339 = vrot.lane.b32.xlu0 %v242, 126
        %v340 = vpop.permute.xlu0 %339
        %341 = vrot.lane.b32.xlu0 %v243, 126
        %v342 = vpop.permute.xlu0 %341
        %343 = vrot.lane.b32.xlu0 %v244, 126
        %v344 = vpop.permute.xlu0 %343
        %s345 = sld [smem:[#allocation4 + $0x5]]
        %s346 = sld [smem:[#allocation4 + $0x36]]
        %v347 = vstv %s345
        %v348 = vmul.f32 %v347, %v338
        %v349 = vmul.f32 %v347, %v340
        %v350 = vstv %s346
        %v351 = vmul.f32 %v350, %v342
        %v352 = vmul.f32 %v350, %v344
        %v353 = vadd.f32 %v348, %v351
        %v354 = vadd.f32 %v349, %v352
        %v355 = vadd.f32 %v335, %v353
        %v356 = vadd.f32 %v336, %v354
        %357 = vrot.lane.b32.xlu0 %v241, 125
        %v358 = vpop.permute.xlu0 %357
        %359 = vrot.lane.b32.xlu0 %v242, 125
        %v360 = vpop.permute.xlu0 %359
        %361 = vrot.lane.b32.xlu0 %v243, 125
        %v362 = vpop.permute.xlu0 %361
        %363 = vrot.lane.b32.xlu0 %v244, 125
        %v364 = vpop.permute.xlu0 %363
        %s365 = sld [smem:[#allocation4 + $0x6]]
        %s366 = sld [smem:[#allocation4 + $0x37]]
        %v367 = vstv %s365
        %v368 = vmul.f32 %v367, %v358
        %v369 = vmul.f32 %v367, %v360
        %v370 = vstv %s366
        %v371 = vmul.f32 %v370, %v362
        %v372 = vmul.f32 %v370, %v364
        %v373 = vadd.f32 %v368, %v371
        %v374 = vadd.f32 %v369, %v372
        %v375 = vadd.f32 %v355, %v373
        %v376 = vadd.f32 %v356, %v374
        %v377 = vld [vmem:[#allocation2 + $0x6] sm:$0xff]
        %v378 = vld [vmem:[#allocation2 + $0xe] sm:$0xff]
        %v379 = vld [vmem:[%s238 + $0x6] sm:$0xff]
        %v380 = vld [vmem:[%s238 + $0xe] sm:$0xff]
        %381 = vrot.lane.b32.xlu0 %v377, 3
        %v382 = vpop.permute.xlu0 %381
        %383 = vrot.lane.b32.xlu0 %v378, 3
        %v384 = vpop.permute.xlu0 %383
        %385 = vrot.lane.b32.xlu0 %v379, 3
        %v386 = vpop.permute.xlu0 %385
        %387 = vrot.lane.b32.xlu0 %v380, 3
        %v388 = vpop.permute.xlu0 %387
        %s389 = sld [smem:[#allocation4 + $0x7]]
        %s390 = sld [smem:[#allocation4 + $0x38]]
        %v391 = vstv %s389
        %v392 = vmul.f32 %v391, %v382
        %v393 = vmul.f32 %v391, %v384
        %v394 = vstv %s390
        %v395 = vmul.f32 %v394, %v386
        %v396 = vmul.f32 %v394, %v388
        %v397 = vadd.f32 %v392, %v395
        %v398 = vadd.f32 %v393, %v396
        %v399 = vadd.f32 %v375, %v397
        %v400 = vadd.f32 %v376, %v398
        %401 = vrot.lane.b32.xlu0 %v377, 2
        %v402 = vpop.permute.xlu0 %401
        %403 = vrot.lane.b32.xlu0 %v378, 2
        %v404 = vpop.permute.xlu0 %403
        %405 = vrot.lane.b32.xlu0 %v379, 2
        %v406 = vpop.permute.xlu0 %405
        %407 = vrot.lane.b32.xlu0 %v380, 2
        %v408 = vpop.permute.xlu0 %407
        %s409 = sld [smem:[#allocation4 + $0x8]]
        %s410 = sld [smem:[#allocation4 + $0x39]]
        %v411 = vstv %s409
        %v412 = vmul.f32 %v411, %v402
        %v413 = vmul.f32 %v411, %v404
        %v414 = vstv %s410
        %v415 = vmul.f32 %v414, %v406
        %v416 = vmul.f32 %v414, %v408
        %v417 = vadd.f32 %v412, %v415
        %v418 = vadd.f32 %v413, %v416
        %v419 = vadd.f32 %v399, %v417
        %v420 = vadd.f32 %v400, %v418
        %421 = vrot.lane.b32.xlu0 %v377, 1
        %v422 = vpop.permute.xlu0 %421
        %423 = vrot.lane.b32.xlu0 %v378, 1
        %v424 = vpop.permute.xlu0 %423
        %425 = vrot.lane.b32.xlu0 %v379, 1
        %v426 = vpop.permute.xlu0 %425
        %427 = vrot.lane.b32.xlu0 %v380, 1
        %v428 = vpop.permute.xlu0 %427
        %s429 = sld [smem:[#allocation4 + $0x9]]
        %s430 = sld [smem:[#allocation4 + $0x3a]]
        %v431 = vstv %s429
        %v432 = vmul.f32 %v431, %v422
        %v433 = vmul.f32 %v431, %v424
        %v434 = vstv %s430
        %v435 = vmul.f32 %v434, %v426
        %v436 = vmul.f32 %v434, %v428
        %v437 = vadd.f32 %v432, %v435
        %v438 = vadd.f32 %v433, %v436
        %v439 = vadd.f32 %v419, %v437
        %v440 = vadd.f32 %v420, %v438
        %s441 = sld [smem:[#allocation4 + $0xa]]
        %s442 = sld [smem:[#allocation4 + $0x3b]]
        %v443 = vstv %s441
        %v444 = vmul.f32 %v443, %v377
        %v445 = vmul.f32 %v443, %v378
        %v446 = vstv %s442
        %v447 = vmul.f32 %v446, %v379
        %v448 = vmul.f32 %v446, %v380
        %v449 = vadd.f32 %v444, %v447
        %v450 = vadd.f32 %v445, %v448
        %v451 = vadd.f32 %v439, %v449
        %v452 = vadd.f32 %v440, %v450
        %453 = vrot.lane.b32.xlu0 %v377, 127
        %v454 = vpop.permute.xlu0 %453
        %455 = vrot.lane.b32.xlu0 %v378, 127
        %v456 = vpop.permute.xlu0 %455
        %457 = vrot.lane.b32.xlu0 %v379, 127
        %v458 = vpop.permute.xlu0 %457
        %459 = vrot.lane.b32.xlu0 %v380, 127
        %v460 = vpop.permute.xlu0 %459
        %s461 = sld [smem:[#allocation4 + $0xb]]
        %s462 = sld [smem:[#allocation4 + $0x3c]]
        %v463 = vstv %s461
        %v464 = vmul.f32 %v463, %v454
        %v465 = vmul.f32 %v463, %v456
        %v466 = vstv %s462
        %v467 = vmul.f32 %v466, %v458
        %v468 = vmul.f32 %v466, %v460
        %v469 = vadd.f32 %v464, %v467
        %v470 = vadd.f32 %v465, %v468
        %v471 = vadd.f32 %v451, %v469
        %v472 = vadd.f32 %v452, %v470
        %473 = vrot.lane.b32.xlu0 %v377, 126
        %v474 = vpop.permute.xlu0 %473
        %475 = vrot.lane.b32.xlu0 %v378, 126
        %v476 = vpop.permute.xlu0 %475
        %477 = vrot.lane.b32.xlu0 %v379, 126
        %v478 = vpop.permute.xlu0 %477
        %479 = vrot.lane.b32.xlu0 %v380, 126
        %v480 = vpop.permute.xlu0 %479
        %s481 = sld [smem:[#allocation4 + $0xc]]
        %s482 = sld [smem:[#allocation4 + $0x3d]]
        %v483 = vstv %s481
        %v484 = vmul.f32 %v483, %v474
        %v485 = vmul.f32 %v483, %v476
        %v486 = vstv %s482
        %v487 = vmul.f32 %v486, %v478
        %v488 = vmul.f32 %v486, %v480
        %v489 = vadd.f32 %v484, %v487
        %v490 = vadd.f32 %v485, %v488
        %v491 = vadd.f32 %v471, %v489
        %v492 = vadd.f32 %v472, %v490
        %493 = vrot.lane.b32.xlu0 %v377, 125
        %v494 = vpop.permute.xlu0 %493
        %495 = vrot.lane.b32.xlu0 %v378, 125
        %v496 = vpop.permute.xlu0 %495
        %497 = vrot.lane.b32.xlu0 %v379, 125
        %v498 = vpop.permute.xlu0 %497
        %499 = vrot.lane.b32.xlu0 %v380, 125
        %v500 = vpop.permute.xlu0 %499
        %s501 = sld [smem:[#allocation4 + $0xd]]
        %s502 = sld [smem:[#allocation4 + $0x3e]]
        %v503 = vstv %s501
        %v504 = vmul.f32 %v503, %v494
        %v505 = vmul.f32 %v503, %v496
        %v506 = vstv %s502
        %v507 = vmul.f32 %v506, %v498
        %v508 = vmul.f32 %v506, %v500
        %v509 = vadd.f32 %v504, %v507
        %v510 = vadd.f32 %v505, %v508
        %v511 = vadd.f32 %v491, %v509
        %v512 = vadd.f32 %v492, %v510
        %v513 = vld [vmem:[#allocation2 + $0x7] sm:$0xff]
        %v514 = vld [vmem:[#allocation2 + $0xf] sm:$0xff]
        %v515 = vld [vmem:[%s238 + $0x7] sm:$0xff]
        %v516 = vld [vmem:[%s238 + $0xf] sm:$0xff]
        %517 = vrot.lane.b32.xlu0 %v513, 3
        %v518 = vpop.permute.xlu0 %517
        %519 = vrot.lane.b32.xlu0 %v514, 3
        %v520 = vpop.permute.xlu0 %519
        %521 = vrot.lane.b32.xlu0 %v515, 3
        %v522 = vpop.permute.xlu0 %521
        %523 = vrot.lane.b32.xlu0 %v516, 3
        %v524 = vpop.permute.xlu0 %523
        %s525 = sld [smem:[#allocation4 + $0xe]]
        %s526 = sld [smem:[#allocation4 + $0x3f]]
        %v527 = vstv %s525
        %v528 = vmul.f32 %v527, %v518
        %v529 = vmul.f32 %v527, %v520
        %v530 = vstv %s526
        %v531 = vmul.f32 %v530, %v522
        %v532 = vmul.f32 %v530, %v524
        %v533 = vadd.f32 %v528, %v531
        %v534 = vadd.f32 %v529, %v532
        %v535 = vadd.f32 %v511, %v533
        %v536 = vadd.f32 %v512, %v534
        %537 = vrot.lane.b32.xlu0 %v513, 2
        %v538 = vpop.permute.xlu0 %537
        %539 = vrot.lane.b32.xlu0 %v514, 2
        %v540 = vpop.permute.xlu0 %539
        %541 = vrot.lane.b32.xlu0 %v515, 2
        %v542 = vpop.permute.xlu0 %541
        %543 = vrot.lane.b32.xlu0 %v516, 2
        %v544 = vpop.permute.xlu0 %543
        %s545 = sld [smem:[#allocation4 + $0xf]]
        %s546 = sld [smem:[#allocation4 + $0x40]]
        %v547 = vstv %s545
        %v548 = vmul.f32 %v547, %v538
        %v549 = vmul.f32 %v547, %v540
        %v550 = vstv %s546
        %v551 = vmul.f32 %v550, %v542
        %v552 = vmul.f32 %v550, %v544
        %v553 = vadd.f32 %v548, %v551
        %v554 = vadd.f32 %v549, %v552
        %v555 = vadd.f32 %v535, %v553
        %v556 = vadd.f32 %v536, %v554
        %557 = vrot.lane.b32.xlu0 %v513, 1
        %v558 = vpop.permute.xlu0 %557
        %559 = vrot.lane.b32.xlu0 %v514, 1
        %v560 = vpop.permute.xlu0 %559
        %561 = vrot.lane.b32.xlu0 %v515, 1
        %v562 = vpop.permute.xlu0 %561
        %563 = vrot.lane.b32.xlu0 %v516, 1
        %v564 = vpop.permute.xlu0 %563
        %s565 = sld [smem:[#allocation4 + $0x10]]
        %s566 = sld [smem:[#allocation4 + $0x41]]
        %v567 = vstv %s565
        %v568 = vmul.f32 %v567, %v558
        %v569 = vmul.f32 %v567, %v560
        %v570 = vstv %s566
        %v571 = vmul.f32 %v570, %v562
        %v572 = vmul.f32 %v570, %v564
        %v573 = vadd.f32 %v568, %v571
        %v574 = vadd.f32 %v569, %v572
        %v575 = vadd.f32 %v555, %v573
        %v576 = vadd.f32 %v556, %v574
        %s577 = sld [smem:[#allocation4 + $0x11]]
        %s578 = sld [smem:[#allocation4 + $0x42]]
        %v579 = vstv %s577
        %v580 = vmul.f32 %v579, %v513
        %v581 = vmul.f32 %v579, %v514
        %v582 = vstv %s578
        %v583 = vmul.f32 %v582, %v515
        %v584 = vmul.f32 %v582, %v516
        %v585 = vadd.f32 %v580, %v583
        %v586 = vadd.f32 %v581, %v584
        %v587 = vadd.f32 %v575, %v585
        %v588 = vadd.f32 %v576, %v586
        %589 = vrot.lane.b32.xlu0 %v513, 127
        %v590 = vpop.permute.xlu0 %589
        %591 = vrot.lane.b32.xlu0 %v514, 127
        %v592 = vpop.permute.xlu0 %591
        %593 = vrot.lane.b32.xlu0 %v515, 127
        %v594 = vpop.permute.xlu0 %593
        %595 = vrot.lane.b32.xlu0 %v516, 127
        %v596 = vpop.permute.xlu0 %595
        %s597 = sld [smem:[#allocation4 + $0x12]]
        %s598 = sld [smem:[#allocation4 + $0x43]]
        %v599 = vstv %s597
        %v600 = vmul.f32 %v599, %v590
        %v601 = vmul.f32 %v599, %v592
        %v602 = vstv %s598
        %v603 = vmul.f32 %v602, %v594
        %v604 = vmul.f32 %v602, %v596
        %v605 = vadd.f32 %v600, %v603
        %v606 = vadd.f32 %v601, %v604
        %v607 = vadd.f32 %v587, %v605
        %v608 = vadd.f32 %v588, %v606
        %609 = vrot.lane.b32.xlu0 %v513, 126
        %v610 = vpop.permute.xlu0 %609
        %611 = vrot.lane.b32.xlu0 %v514, 126
        %v612 = vpop.permute.xlu0 %611
        %613 = vrot.lane.b32.xlu0 %v515, 126
        %v614 = vpop.permute.xlu0 %613
        %615 = vrot.lane.b32.xlu0 %v516, 126
        %v616 = vpop.permute.xlu0 %615
        %s617 = sld [smem:[#allocation4 + $0x13]]
        %s618 = sld [smem:[#allocation4 + $0x44]]
        %v619 = vstv %s617
        %v620 = vmul.f32 %v619, %v610
        %v621 = vmul.f32 %v619, %v612
        %v622 = vstv %s618
        %v623 = vmul.f32 %v622, %v614
        %v624 = vmul.f32 %v622, %v616
        %v625 = vadd.f32 %v620, %v623
        %v626 = vadd.f32 %v621, %v624
        %v627 = vadd.f32 %v607, %v625
        %v628 = vadd.f32 %v608, %v626
        %629 = vrot.lane.b32.xlu0 %v513, 125
        %v630 = vpop.permute.xlu0 %629
        %631 = vrot.lane.b32.xlu0 %v514, 125
        %v632 = vpop.permute.xlu0 %631
        %633 = vrot.lane.b32.xlu0 %v515, 125
        %v634 = vpop.permute.xlu0 %633
        %635 = vrot.lane.b32.xlu0 %v516, 125
        %v636 = vpop.permute.xlu0 %635
        %s637 = sld [smem:[#allocation4 + $0x14]]
        %s638 = sld [smem:[#allocation4 + $0x45]]
        %v639 = vstv %s637
        %v640 = vmul.f32 %v639, %v630
        %v641 = vmul.f32 %v639, %v632
        %v642 = vstv %s638
        %v643 = vmul.f32 %v642, %v634
        %v644 = vmul.f32 %v642, %v636
        %v645 = vadd.f32 %v640, %v643
        %v646 = vadd.f32 %v641, %v644
        %v647 = vadd.f32 %v627, %v645
        %v648 = vadd.f32 %v628, %v646
        %v649 = vld [vmem:[#allocation2 + $0x8] sm:$0xff]
        %v650 = vld [vmem:[#allocation2 + $0x10] sm:$0xff]
        %v651 = vld [vmem:[%s238 + $0x8] sm:$0xff]
        %v652 = vld [vmem:[%s238 + $0x10] sm:$0xff]
        %653 = vrot.lane.b32.xlu0 %v649, 3
        %v654 = vpop.permute.xlu0 %653
        %655 = vrot.lane.b32.xlu0 %v650, 3
        %v656 = vpop.permute.xlu0 %655
        %657 = vrot.lane.b32.xlu0 %v651, 3
        %v658 = vpop.permute.xlu0 %657
        %659 = vrot.lane.b32.xlu0 %v652, 3
        %v660 = vpop.permute.xlu0 %659
        %s661 = sld [smem:[#allocation4 + $0x15]]
        %s662 = sld [smem:[#allocation4 + $0x46]]
        %v663 = vstv %s661
        %v664 = vmul.f32 %v663, %v654
        %v665 = vmul.f32 %v663, %v656
        %v666 = vstv %s662
        %v667 = vmul.f32 %v666, %v658
        %v668 = vmul.f32 %v666, %v660
        %v669 = vadd.f32 %v664, %v667
        %v670 = vadd.f32 %v665, %v668
        %v671 = vadd.f32 %v647, %v669
        %v672 = vadd.f32 %v648, %v670
        %673 = vrot.lane.b32.xlu0 %v649, 2
        %v674 = vpop.permute.xlu0 %673
        %675 = vrot.lane.b32.xlu0 %v650, 2
        %v676 = vpop.permute.xlu0 %675
        %677 = vrot.lane.b32.xlu0 %v651, 2
        %v678 = vpop.permute.xlu0 %677
        %679 = vrot.lane.b32.xlu0 %v652, 2
        %v680 = vpop.permute.xlu0 %679
        %s681 = sld [smem:[#allocation4 + $0x16]]
        %s682 = sld [smem:[#allocation4 + $0x47]]
        %v683 = vstv %s681
        %v684 = vmul.f32 %v683, %v674
        %v685 = vmul.f32 %v683, %v676
        %v686 = vstv %s682
        %v687 = vmul.f32 %v686, %v678
        %v688 = vmul.f32 %v686, %v680
        %v689 = vadd.f32 %v684, %v687
        %v690 = vadd.f32 %v685, %v688
        %v691 = vadd.f32 %v671, %v689
        %v692 = vadd.f32 %v672, %v690
        %693 = vrot.lane.b32.xlu0 %v649, 1
        %v694 = vpop.permute.xlu0 %693
        %695 = vrot.lane.b32.xlu0 %v650, 1
        %v696 = vpop.permute.xlu0 %695
        %697 = vrot.lane.b32.xlu0 %v651, 1
        %v698 = vpop.permute.xlu0 %697
        %699 = vrot.lane.b32.xlu0 %v652, 1
        %v700 = vpop.permute.xlu0 %699
        %s701 = sld [smem:[#allocation4 + $0x17]]
        %s702 = sld [smem:[#allocation4 + $0x48]]
        %v703 = vstv %s701
        %v704 = vmul.f32 %v703, %v694
        %v705 = vmul.f32 %v703, %v696
        %v706 = vstv %s702
        %v707 = vmul.f32 %v706, %v698
        %v708 = vmul.f32 %v706, %v700
        %v709 = vadd.f32 %v704, %v707
        %v710 = vadd.f32 %v705, %v708
        %v711 = vadd.f32 %v691, %v709
        %v712 = vadd.f32 %v692, %v710
        %s713 = sld [smem:[#allocation4 + $0x18]]
        %s714 = sld [smem:[#allocation4 + $0x49]]
        %v715 = vstv %s713
        %v716 = vmul.f32 %v715, %v649
        %v717 = vmul.f32 %v715, %v650
        %v718 = vstv %s714
        %v719 = vmul.f32 %v718, %v651
        %v720 = vmul.f32 %v718, %v652
        %v721 = vadd.f32 %v716, %v719
        %v722 = vadd.f32 %v717, %v720
        %v723 = vadd.f32 %v711, %v721
        %v724 = vadd.f32 %v712, %v722
        %725 = vrot.lane.b32.xlu0 %v649, 127
        %v726 = vpop.permute.xlu0 %725
        %727 = vrot.lane.b32.xlu0 %v650, 127
        %v728 = vpop.permute.xlu0 %727
        %729 = vrot.lane.b32.xlu0 %v651, 127
        %v730 = vpop.permute.xlu0 %729
        %731 = vrot.lane.b32.xlu0 %v652, 127
        %v732 = vpop.permute.xlu0 %731
        %s733 = sld [smem:[#allocation4 + $0x19]]
        %s734 = sld [smem:[#allocation4 + $0x4a]]
        %v735 = vstv %s733
        %v736 = vmul.f32 %v735, %v726
        %v737 = vmul.f32 %v735, %v728
        %v738 = vstv %s734
        %v739 = vmul.f32 %v738, %v730
        %v740 = vmul.f32 %v738, %v732
        %v741 = vadd.f32 %v736, %v739
        %v742 = vadd.f32 %v737, %v740
        %v743 = vadd.f32 %v723, %v741
        %v744 = vadd.f32 %v724, %v742
        %745 = vrot.lane.b32.xlu0 %v649, 126
        %v746 = vpop.permute.xlu0 %745
        %747 = vrot.lane.b32.xlu0 %v650, 126
        %v748 = vpop.permute.xlu0 %747
        %749 = vrot.lane.b32.xlu0 %v651, 126
        %v750 = vpop.permute.xlu0 %749
        %751 = vrot.lane.b32.xlu0 %v652, 126
        %v752 = vpop.permute.xlu0 %751
        %s753 = sld [smem:[#allocation4 + $0x1a]]
        %s754 = sld [smem:[#allocation4 + $0x4b]]
        %v755 = vstv %s753
        %v756 = vmul.f32 %v755, %v746
        %v757 = vmul.f32 %v755, %v748
        %v758 = vstv %s754
        %v759 = vmul.f32 %v758, %v750
        %v760 = vmul.f32 %v758, %v752
        %v761 = vadd.f32 %v756, %v759
        %v762 = vadd.f32 %v757, %v760
        %v763 = vadd.f32 %v743, %v761
        %v764 = vadd.f32 %v744, %v762
        %765 = vrot.lane.b32.xlu0 %v649, 125
        %v766 = vpop.permute.xlu0 %765
        %767 = vrot.lane.b32.xlu0 %v650, 125
        %v768 = vpop.permute.xlu0 %767
        %769 = vrot.lane.b32.xlu0 %v651, 125
        %v770 = vpop.permute.xlu0 %769
        %771 = vrot.lane.b32.xlu0 %v652, 125
        %v772 = vpop.permute.xlu0 %771
        %s773 = sld [smem:[#allocation4 + $0x1b]]
        %s774 = sld [smem:[#allocation4 + $0x4c]]
        %v775 = vstv %s773
        %v776 = vmul.f32 %v775, %v766
        %v777 = vmul.f32 %v775, %v768
        %v778 = vstv %s774
        %v779 = vmul.f32 %v778, %v770
        %v780 = vmul.f32 %v778, %v772
        %v781 = vadd.f32 %v776, %v779
        %v782 = vadd.f32 %v777, %v780
        %v783 = vadd.f32 %v763, %v781
        %v784 = vadd.f32 %v764, %v782
        %v785 = vld [vmem:[#allocation2 + $0x9] sm:$0xff]
        %v786 = vld [vmem:[#allocation2 + $0x11] sm:$0xff]
        %v787 = vld [vmem:[%s238 + $0x9] sm:$0xff]
        %v788 = vld [vmem:[%s238 + $0x11] sm:$0xff]
        %789 = vrot.lane.b32.xlu0 %v785, 3
        %v790 = vpop.permute.xlu0 %789
        %791 = vrot.lane.b32.xlu0 %v786, 3
        %v792 = vpop.permute.xlu0 %791
        %793 = vrot.lane.b32.xlu0 %v787, 3
        %v794 = vpop.permute.xlu0 %793
        %795 = vrot.lane.b32.xlu0 %v788, 3
        %v796 = vpop.permute.xlu0 %795
        %s797 = sld [smem:[#allocation4 + $0x1c]]
        %s798 = sld [smem:[#allocation4 + $0x4d]]
        %v799 = vstv %s797
        %v800 = vmul.f32 %v799, %v790
        %v801 = vmul.f32 %v799, %v792
        %v802 = vstv %s798
        %v803 = vmul.f32 %v802, %v794
        %v804 = vmul.f32 %v802, %v796
        %v805 = vadd.f32 %v800, %v803
        %v806 = vadd.f32 %v801, %v804
        %v807 = vadd.f32 %v783, %v805
        %v808 = vadd.f32 %v784, %v806
        %809 = vrot.lane.b32.xlu0 %v785, 2
        %v810 = vpop.permute.xlu0 %809
        %811 = vrot.lane.b32.xlu0 %v786, 2
        %v812 = vpop.permute.xlu0 %811
        %813 = vrot.lane.b32.xlu0 %v787, 2
        %v814 = vpop.permute.xlu0 %813
        %815 = vrot.lane.b32.xlu0 %v788, 2
        %v816 = vpop.permute.xlu0 %815
        %s817 = sld [smem:[#allocation4 + $0x1d]]
        %s818 = sld [smem:[#allocation4 + $0x4e]]
        %v819 = vstv %s817
        %v820 = vmul.f32 %v819, %v810
        %v821 = vmul.f32 %v819, %v812
        %v822 = vstv %s818
        %v823 = vmul.f32 %v822, %v814
        %v824 = vmul.f32 %v822, %v816
        %v825 = vadd.f32 %v820, %v823
        %v826 = vadd.f32 %v821, %v824
        %v827 = vadd.f32 %v807, %v825
        %v828 = vadd.f32 %v808, %v826
        %829 = vrot.lane.b32.xlu0 %v785, 1
        %v830 = vpop.permute.xlu0 %829
        %831 = vrot.lane.b32.xlu0 %v786, 1
        %v832 = vpop.permute.xlu0 %831
        %833 = vrot.lane.b32.xlu0 %v787, 1
        %v834 = vpop.permute.xlu0 %833
        %835 = vrot.lane.b32.xlu0 %v788, 1
        %v836 = vpop.permute.xlu0 %835
        %s837 = sld [smem:[#allocation4 + $0x1e]]
        %s838 = sld [smem:[#allocation4 + $0x4f]]
        %v839 = vstv %s837
        %v840 = vmul.f32 %v839, %v830
        %v841 = vmul.f32 %v839, %v832
        %v842 = vstv %s838
        %v843 = vmul.f32 %v842, %v834
        %v844 = vmul.f32 %v842, %v836
        %v845 = vadd.f32 %v840, %v843
        %v846 = vadd.f32 %v841, %v844
        %v847 = vadd.f32 %v827, %v845
        %v848 = vadd.f32 %v828, %v846
        %s849 = sld [smem:[#allocation4 + $0x1f]]
        %s850 = sld [smem:[#allocation4 + $0x50]]
        %v851 = vstv %s849
        %v852 = vmul.f32 %v851, %v785
        %v853 = vmul.f32 %v851, %v786
        %v854 = vstv %s850
        %v855 = vmul.f32 %v854, %v787
        %v856 = vmul.f32 %v854, %v788
        %v857 = vadd.f32 %v852, %v855
        %v858 = vadd.f32 %v853, %v856
        %v859 = vadd.f32 %v847, %v857
        %v860 = vadd.f32 %v848, %v858
        %861 = vrot.lane.b32.xlu0 %v785, 127
        %v862 = vpop.permute.xlu0 %861
        %863 = vrot.lane.b32.xlu0 %v786, 127
        %v864 = vpop.permute.xlu0 %863
        %865 = vrot.lane.b32.xlu0 %v787, 127
        %v866 = vpop.permute.xlu0 %865
        %867 = vrot.lane.b32.xlu0 %v788, 127
        %v868 = vpop.permute.xlu0 %867
        %s869 = sld [smem:[#allocation4 + $0x20]]
        %s870 = sld [smem:[#allocation4 + $0x51]]
        %v871 = vstv %s869
        %v872 = vmul.f32 %v871, %v862
        %v873 = vmul.f32 %v871, %v864
        %v874 = vstv %s870
        %v875 = vmul.f32 %v874, %v866
        %v876 = vmul.f32 %v874, %v868
        %v877 = vadd.f32 %v872, %v875
        %v878 = vadd.f32 %v873, %v876
        %v879 = vadd.f32 %v859, %v877
        %v880 = vadd.f32 %v860, %v878
        %881 = vrot.lane.b32.xlu0 %v785, 126
        %v882 = vpop.permute.xlu0 %881
        %883 = vrot.lane.b32.xlu0 %v786, 126
        %v884 = vpop.permute.xlu0 %883
        %885 = vrot.lane.b32.xlu0 %v787, 126
        %v886 = vpop.permute.xlu0 %885
        %887 = vrot.lane.b32.xlu0 %v788, 126
        %v888 = vpop.permute.xlu0 %887
        %s889 = sld [smem:[#allocation4 + $0x21]]
        %s890 = sld [smem:[#allocation4 + $0x52]]
        %v891 = vstv %s889
        %v892 = vmul.f32 %v891, %v882
        %v893 = vmul.f32 %v891, %v884
        %v894 = vstv %s890
        %v895 = vmul.f32 %v894, %v886
        %v896 = vmul.f32 %v894, %v888
        %v897 = vadd.f32 %v892, %v895
        %v898 = vadd.f32 %v893, %v896
        %v899 = vadd.f32 %v879, %v897
        %v900 = vadd.f32 %v880, %v898
        %901 = vrot.lane.b32.xlu0 %v785, 125
        %v902 = vpop.permute.xlu0 %901
        %903 = vrot.lane.b32.xlu0 %v786, 125
        %v904 = vpop.permute.xlu0 %903
        %905 = vrot.lane.b32.xlu0 %v787, 125
        %v906 = vpop.permute.xlu0 %905
        %907 = vrot.lane.b32.xlu0 %v788, 125
        %v908 = vpop.permute.xlu0 %907
        %s909 = sld [smem:[#allocation4 + $0x22]]
        %s910 = sld [smem:[#allocation4 + $0x53]]
        %v911 = vstv %s909
        %v912 = vmul.f32 %v911, %v902
        %v913 = vmul.f32 %v911, %v904
        %v914 = vstv %s910
        %v915 = vmul.f32 %v914, %v906
        %v916 = vmul.f32 %v914, %v908
        %v917 = vadd.f32 %v912, %v915
        %v918 = vadd.f32 %v913, %v916
        %v919 = vadd.f32 %v899, %v917
        %v920 = vadd.f32 %v900, %v918
        %v921 = vld [vmem:[#allocation2 + $0xa] sm:$0xff]
        %v922 = vld [vmem:[#allocation2 + $0x12] sm:$0xff]
        %v923 = vld [vmem:[%s238 + $0xa] sm:$0xff]
        %v924 = vld [vmem:[%s238 + $0x12] sm:$0xff]
        %925 = vrot.lane.b32.xlu0 %v921, 3
        %v926 = vpop.permute.xlu0 %925
        %927 = vrot.lane.b32.xlu0 %v922, 3
        %v928 = vpop.permute.xlu0 %927
        %929 = vrot.lane.b32.xlu0 %v923, 3
        %v930 = vpop.permute.xlu0 %929
        %931 = vrot.lane.b32.xlu0 %v924, 3
        %v932 = vpop.permute.xlu0 %931
        %s933 = sld [smem:[#allocation4 + $0x23]]
        %s934 = sld [smem:[#allocation4 + $0x54]]
        %v935 = vstv %s933
        %v936 = vmul.f32 %v935, %v926
        %v937 = vmul.f32 %v935, %v928
        %v938 = vstv %s934
        %v939 = vmul.f32 %v938, %v930
        %v940 = vmul.f32 %v938, %v932
        %v941 = vadd.f32 %v936, %v939
        %v942 = vadd.f32 %v937, %v940
        %v943 = vadd.f32 %v919, %v941
        %v944 = vadd.f32 %v920, %v942
        %945 = vrot.lane.b32.xlu0 %v921, 2
        %v946 = vpop.permute.xlu0 %945
        %947 = vrot.lane.b32.xlu0 %v922, 2
        %v948 = vpop.permute.xlu0 %947
        %949 = vrot.lane.b32.xlu0 %v923, 2
        %v950 = vpop.permute.xlu0 %949
        %951 = vrot.lane.b32.xlu0 %v924, 2
        %v952 = vpop.permute.xlu0 %951
        %s953 = sld [smem:[#allocation4 + $0x24]]
        %s954 = sld [smem:[#allocation4 + $0x55]]
        %v955 = vstv %s953
        %v956 = vmul.f32 %v955, %v946
        %v957 = vmul.f32 %v955, %v948
        %v958 = vstv %s954
        %v959 = vmul.f32 %v958, %v950
        %v960 = vmul.f32 %v958, %v952
        %v961 = vadd.f32 %v956, %v959
        %v962 = vadd.f32 %v957, %v960
        %v963 = vadd.f32 %v943, %v961
        %v964 = vadd.f32 %v944, %v962
        %965 = vrot.lane.b32.xlu0 %v921, 1
        %v966 = vpop.permute.xlu0 %965
        %967 = vrot.lane.b32.xlu0 %v922, 1
        %v968 = vpop.permute.xlu0 %967
        %969 = vrot.lane.b32.xlu0 %v923, 1
        %v970 = vpop.permute.xlu0 %969
        %971 = vrot.lane.b32.xlu0 %v924, 1
        %v972 = vpop.permute.xlu0 %971
        %s973 = sld [smem:[#allocation4 + $0x25]]
        %s974 = sld [smem:[#allocation4 + $0x56]]
        %v975 = vstv %s973
        %v976 = vmul.f32 %v975, %v966
        %v977 = vmul.f32 %v975, %v968
        %v978 = vstv %s974
        %v979 = vmul.f32 %v978, %v970
        %v980 = vmul.f32 %v978, %v972
        %v981 = vadd.f32 %v976, %v979
        %v982 = vadd.f32 %v977, %v980
        %v983 = vadd.f32 %v963, %v981
        %v984 = vadd.f32 %v964, %v982
        %s985 = sld [smem:[#allocation4 + $0x26]]
        %s986 = sld [smem:[#allocation4 + $0x57]]
        %v987 = vstv %s985
        %v988 = vmul.f32 %v987, %v921
        %v989 = vmul.f32 %v987, %v922
        %v990 = vstv %s986
        %v991 = vmul.f32 %v990, %v923
        %v992 = vmul.f32 %v990, %v924
        %v993 = vadd.f32 %v988, %v991
        %v994 = vadd.f32 %v989, %v992
        %v995 = vadd.f32 %v983, %v993
        %v996 = vadd.f32 %v984, %v994
        %997 = vrot.lane.b32.xlu0 %v921, 127
        %v998 = vpop.permute.xlu0 %997
        %999 = vrot.lane.b32.xlu0 %v922, 127
        %v1000 = vpop.permute.xlu0 %999
        %1001 = vrot.lane.b32.xlu0 %v923, 127
        %v1002 = vpop.permute.xlu0 %1001
        %1003 = vrot.lane.b32.xlu0 %v924, 127
        %v1004 = vpop.permute.xlu0 %1003
        %s1005 = sld [smem:[#allocation4 + $0x27]]
        %s1006 = sld [smem:[#allocation4 + $0x58]]
        %v1007 = vstv %s1005
        %v1008 = vmul.f32 %v1007, %v998
        %v1009 = vmul.f32 %v1007, %v1000
        %v1010 = vstv %s1006
        %v1011 = vmul.f32 %v1010, %v1002
        %v1012 = vmul.f32 %v1010, %v1004
        %v1013 = vadd.f32 %v1008, %v1011
        %v1014 = vadd.f32 %v1009, %v1012
        %v1015 = vadd.f32 %v995, %v1013
        %v1016 = vadd.f32 %v996, %v1014
        %1017 = vrot.lane.b32.xlu0 %v921, 126
        %v1018 = vpop.permute.xlu0 %1017
        %1019 = vrot.lane.b32.xlu0 %v922, 126
        %v1020 = vpop.permute.xlu0 %1019
        %1021 = vrot.lane.b32.xlu0 %v923, 126
        %v1022 = vpop.permute.xlu0 %1021
        %1023 = vrot.lane.b32.xlu0 %v924, 126
        %v1024 = vpop.permute.xlu0 %1023
        %s1025 = sld [smem:[#allocation4 + $0x28]]
        %s1026 = sld [smem:[#allocation4 + $0x59]]
        %v1027 = vstv %s1025
        %v1028 = vmul.f32 %v1027, %v1018
        %v1029 = vmul.f32 %v1027, %v1020
        %v1030 = vstv %s1026
        %v1031 = vmul.f32 %v1030, %v1022
        %v1032 = vmul.f32 %v1030, %v1024
        %v1033 = vadd.f32 %v1028, %v1031
        %v1034 = vadd.f32 %v1029, %v1032
        %v1035 = vadd.f32 %v1015, %v1033
        %v1036 = vadd.f32 %v1016, %v1034
        %1037 = vrot.lane.b32.xlu0 %v921, 125
        %v1038 = vpop.permute.xlu0 %1037
        %1039 = vrot.lane.b32.xlu0 %v922, 125
        %v1040 = vpop.permute.xlu0 %1039
        %1041 = vrot.lane.b32.xlu0 %v923, 125
        %v1042 = vpop.permute.xlu0 %1041
        %1043 = vrot.lane.b32.xlu0 %v924, 125
        %v1044 = vpop.permute.xlu0 %1043
        %s1045 = sld [smem:[#allocation4 + $0x29]]
        %s1046 = sld [smem:[#allocation4 + $0x5a]]
        %v1047 = vstv %s1045
        %v1048 = vmul.f32 %v1047, %v1038
        %v1049 = vmul.f32 %v1047, %v1040
        %v1050 = vstv %s1046
        %v1051 = vmul.f32 %v1050, %v1042
        %v1052 = vmul.f32 %v1050, %v1044
        %v1053 = vadd.f32 %v1048, %v1051
        %v1054 = vadd.f32 %v1049, %v1052
        %v1055 = vadd.f32 %v1035, %v1053
        %v1056 = vadd.f32 %v1036, %v1054
        %v1057 = vld [vmem:[#allocation2 + $0xb] sm:$0xff]
        %v1058 = vld [vmem:[#allocation2 + $0x13] sm:$0xff]
        %v1059 = vld [vmem:[%s238 + $0xb] sm:$0xff]
        %v1060 = vld [vmem:[%s238 + $0x13] sm:$0xff]
        %1061 = vrot.lane.b32.xlu0 %v1057, 3
        %v1062 = vpop.permute.xlu0 %1061
        %1063 = vrot.lane.b32.xlu0 %v1058, 3
        %v1064 = vpop.permute.xlu0 %1063
        %1065 = vrot.lane.b32.xlu0 %v1059, 3
        %v1066 = vpop.permute.xlu0 %1065
        %1067 = vrot.lane.b32.xlu0 %v1060, 3
        %v1068 = vpop.permute.xlu0 %1067
        %s1069 = sld [smem:[#allocation4 + $0x2a]]
        %s1070 = sld [smem:[#allocation4 + $0x5b]]
        %v1071 = vstv %s1069
        %v1072 = vmul.f32 %v1071, %v1062
        %v1073 = vmul.f32 %v1071, %v1064
        %v1074 = vstv %s1070
        %v1075 = vmul.f32 %v1074, %v1066
        %v1076 = vmul.f32 %v1074, %v1068
        %v1077 = vadd.f32 %v1072, %v1075
        %v1078 = vadd.f32 %v1073, %v1076
        %v1079 = vadd.f32 %v1055, %v1077
        %v1080 = vadd.f32 %v1056, %v1078
        %1081 = vrot.lane.b32.xlu0 %v1057, 2
        %v1082 = vpop.permute.xlu0 %1081
        %1083 = vrot.lane.b32.xlu0 %v1058, 2
        %v1084 = vpop.permute.xlu0 %1083
        %1085 = vrot.lane.b32.xlu0 %v1059, 2
        %v1086 = vpop.permute.xlu0 %1085
        %1087 = vrot.lane.b32.xlu0 %v1060, 2
        %v1088 = vpop.permute.xlu0 %1087
        %s1089 = sld [smem:[#allocation4 + $0x2b]]
        %s1090 = sld [smem:[#allocation4 + $0x5c]]
        %v1091 = vstv %s1089
        %v1092 = vmul.f32 %v1091, %v1082
        %v1093 = vmul.f32 %v1091, %v1084
        %v1094 = vstv %s1090
        %v1095 = vmul.f32 %v1094, %v1086
        %v1096 = vmul.f32 %v1094, %v1088
        %v1097 = vadd.f32 %v1092, %v1095
        %v1098 = vadd.f32 %v1093, %v1096
        %v1099 = vadd.f32 %v1079, %v1097
        %v1100 = vadd.f32 %v1080, %v1098
        %1101 = vrot.lane.b32.xlu0 %v1057, 1
        %v1102 = vpop.permute.xlu0 %1101
        %1103 = vrot.lane.b32.xlu0 %v1058, 1
        %v1104 = vpop.permute.xlu0 %1103
        %1105 = vrot.lane.b32.xlu0 %v1059, 1
        %v1106 = vpop.permute.xlu0 %1105
        %1107 = vrot.lane.b32.xlu0 %v1060, 1
        %v1108 = vpop.permute.xlu0 %1107
        %s1109 = sld [smem:[#allocation4 + $0x2c]]
        %s1110 = sld [smem:[#allocation4 + $0x5d]]
        %v1111 = vstv %s1109
        %v1112 = vmul.f32 %v1111, %v1102
        %v1113 = vmul.f32 %v1111, %v1104
        %v1114 = vstv %s1110
        %v1115 = vmul.f32 %v1114, %v1106
        %v1116 = vmul.f32 %v1114, %v1108
        %v1117 = vadd.f32 %v1112, %v1115
        %v1118 = vadd.f32 %v1113, %v1116
        %v1119 = vadd.f32 %v1099, %v1117
        %v1120 = vadd.f32 %v1100, %v1118
        %s1121 = sld [smem:[#allocation4 + $0x2d]]
        %s1122 = sld [smem:[#allocation4 + $0x5e]]
        %v1123 = vstv %s1121
        %v1124 = vmul.f32 %v1123, %v1057
        %v1125 = vmul.f32 %v1123, %v1058
        %v1126 = vstv %s1122
        %v1127 = vmul.f32 %v1126, %v1059
        %v1128 = vmul.f32 %v1126, %v1060
        %v1129 = vadd.f32 %v1124, %v1127
        %v1130 = vadd.f32 %v1125, %v1128
        %v1131 = vadd.f32 %v1119, %v1129
        %v1132 = vadd.f32 %v1120, %v1130
        %1133 = vrot.lane.b32.xlu0 %v1057, 127
        %v1134 = vpop.permute.xlu0 %1133
        %1135 = vrot.lane.b32.xlu0 %v1058, 127
        %v1136 = vpop.permute.xlu0 %1135
        %1137 = vrot.lane.b32.xlu0 %v1059, 127
        %v1138 = vpop.permute.xlu0 %1137
        %1139 = vrot.lane.b32.xlu0 %v1060, 127
        %v1140 = vpop.permute.xlu0 %1139
        %s1141 = sld [smem:[#allocation4 + $0x2e]]
        %s1142 = sld [smem:[#allocation4 + $0x5f]]
        %v1143 = vstv %s1141
        %v1144 = vmul.f32 %v1143, %v1134
        %v1145 = vmul.f32 %v1143, %v1136
        %v1146 = vstv %s1142
        %v1147 = vmul.f32 %v1146, %v1138
        %v1148 = vmul.f32 %v1146, %v1140
        %v1149 = vadd.f32 %v1144, %v1147
        %v1150 = vadd.f32 %v1145, %v1148
        %v1151 = vadd.f32 %v1131, %v1149
        %v1152 = vadd.f32 %v1132, %v1150
        %1153 = vrot.lane.b32.xlu0 %v1057, 126
        %v1154 = vpop.permute.xlu0 %1153
        %1155 = vrot.lane.b32.xlu0 %v1058, 126
        %v1156 = vpop.permute.xlu0 %1155
        %1157 = vrot.lane.b32.xlu0 %v1059, 126
        %v1158 = vpop.permute.xlu0 %1157
        %1159 = vrot.lane.b32.xlu0 %v1060, 126
        %v1160 = vpop.permute.xlu0 %1159
        %s1161 = sld [smem:[#allocation4 + $0x2f]]
        %s1162 = sld [smem:[#allocation4 + $0x60]]
        %v1163 = vstv %s1161
        %v1164 = vmul.f32 %v1163, %v1154
        %v1165 = vmul.f32 %v1163, %v1156
        %v1166 = vstv %s1162
        %v1167 = vmul.f32 %v1166, %v1158
        %v1168 = vmul.f32 %v1166, %v1160
        %v1169 = vadd.f32 %v1164, %v1167
        %v1170 = vadd.f32 %v1165, %v1168
        %v1171 = vadd.f32 %v1151, %v1169
        %v1172 = vadd.f32 %v1152, %v1170
        %1173 = vrot.lane.b32.xlu0 %v1057, 125
        %v1174 = vpop.permute.xlu0 %1173
        %1175 = vrot.lane.b32.xlu0 %v1058, 125
        %v1176 = vpop.permute.xlu0 %1175
        %1177 = vrot.lane.b32.xlu0 %v1059, 125
        %v1178 = vpop.permute.xlu0 %1177
        %1179 = vrot.lane.b32.xlu0 %v1060, 125
        %v1180 = vpop.permute.xlu0 %1179
        %s1181 = sld [smem:[#allocation4 + $0x30]]
        %s1182 = sld [smem:[#allocation4 + $0x61]]
        %v1183 = vstv %s1181
        %v1184 = vmul.f32 %v1183, %v1174
        %v1185 = vmul.f32 %v1183, %v1176
        %v1186 = vstv %s1182
        %v1187 = vmul.f32 %v1186, %v1178
        %v1188 = vmul.f32 %v1186, %v1180
        %v1189 = vadd.f32 %v1184, %v1187
        %v1190 = vadd.f32 %v1185, %v1188
        %v1191 = vadd.f32 %v1171, %v1189
        %v1192 = vadd.f32 %v1172, %v1190
        %v1193 = vxor.u32 %v1191, 2147483648
        %v1194 = vxor.u32 %v1192, 2147483648
        %v1195 = vmul.f32 %v1193, 1.442695
        %v1196 = vpow.pop %v1195
        %v1197 = vmul.f32 %v1194, 1.442695
        %v1198 = vpow.pop %v1197
        %v1199 = vadd.f32 %v1196, 1.0
        %v1200 = vadd.f32 %v1198, 1.0
        %v1201 = vrcp.pop %v1199
        %v1202 = vmul.f32 1.0, %v1201
        %v1203 = vrcp.pop %v1200
        %v1204 = vmul.f32 1.0, %v1203
        %1205 = vst.msk [vmem:[%s203] sm:$0xff] %vm235, %v1202
        %1206 = vst.msk [vmem:[%s203 + $0x8] sm:$0xff] %vm235, %v1204
        %s1207 = sand.u32 %s98, 1
        %s1208 = scalar_lea.sflag [#allocation6], %s1207
        %s1209 = sand.u32 %s98, 1
        %s1210 = smul.addr %s1209, 16
        %s1211 = scalar_lea.vmem [#allocation9], %s1210
        // Predicated region
        $region48: #{tpu_custom_call.1} parent=31 // pred_check
          %p1212 = pneg %p108
        $region49: #{tpu_custom_call.1} parent=31 // pred_check_branch
          %1214 = sbr.rel (%p1212) target = $region51
        $region50: #{tpu_custom_call.1} parent=31 // pred_region
          %s1216 = ssub.s32 256, 256
          %1217 = vsyncadd %s1208, %s1216
          %s1218 = smul.addr %s22, 2
          %s1219 = smul.addr %s1218, 128
          %s1220 = scalar_lea.hbm %s3, %s1219
          %s1221 = sshll.u32 %s1211, 4
          %s1222 = int_to_ptr.vmem [resolvable:$true] %s1221
          %1227 = dma.vmem_to_hbm [thread:$0]  %s1222, 256, %s1220, %s1208, 128, 128, 8
        $region51: #{tpu_custom_call.1} parent=31 // pred_fallthru
          _
      $region32: #{tpu_custom_call.1} parent=5 // pred_fallthru
        _
      %p1228 = scmp.le.s32.totalorder 2, %s17
      // Predicated region
      $region52: #{tpu_custom_call.1} parent=5 // pred_check
        %p1229 = pneg %p1228
      $region53: #{tpu_custom_call.1} parent=5 // pred_check_branch
        %1231 = sbr.rel (%p1229) target = $region55
      $region54: #{tpu_custom_call.1} parent=5 // pred_region
        %s1232 = ssub.s32 %s17, 2
        // Predicated region
        $region56: #{tpu_custom_call.1} parent=54 // pred_check
          %p1233 = pneg %p114
        $region57: #{tpu_custom_call.1} parent=54 // pred_check_branch
          %1235 = sbr.rel (%p1233) target = $region59
        $region58: #{tpu_custom_call.1} parent=54 // pred_region
          %s1236 = sand.u32 %s99, 1
          %s1237 = scalar_lea.sflag [#allocation6], %s1236
          %s1238 = sand.u32 %s99, 1
          %s1239 = smul.addr %s1238, 16
          %s1240 = scalar_lea.vmem [#allocation9], %s1239
          %1241 = dma.done %s1237, 256
        $region59: #{tpu_custom_call.1} parent=54 // pred_fallthru
          _
      $region55: #{tpu_custom_call.1} parent=5 // pred_fallthru
        _
    $region6: #{tpu_custom_call.1} parent=1 // loop_footer
      %s21 = sadd.s32 1, %s17
    $region7: #{tpu_custom_call.1} parent=1 // loop_footer_branch
      %16 = sbr.rel target = $region3
    $region8: #{tpu_custom_call.1} parent=1 // loop_exit
      _
    %1242 = vsyncpa [#allocation5], 1
    %s1243 = scalar_lea.sflag [#allocation5], 1
    %1244 = vsyncpa %s1243, 1
    %1245 = vsyncpa [#allocation6], 1
    %s1246 = scalar_lea.sflag [#allocation6], 1
    %1247 = vsyncpa %s1246, 1
    %1248 = vsyncpa [#allocation7], 1
    %s1249 = scalar_lea.sflag [#allocation7], 1
    %1250 = vsyncpa %s1249, 1

</llo_original>
